<compile_context>
chip_gen: v6e
topology: v6e:2x2x1
jax: 0.10.0
libtpu: 0.0.40
codegen_flags: <defaults>
</compile_context>

<pallas_src>
import functools

import jax
import jax.numpy as jnp
from jax import lax
from jax.experimental import pallas as pl
from jax.experimental.pallas import tpu as pltpu

_MIB = 1024 * 1024


def _round_up(x, m):
    return ((x + m - 1) // m) * m


def _query_and_group_kernel(new_ref, aug_ref, hi_ref, mid_ref, lo_ref, tri_ref,
                            out_ref, sel_ref, *, radius2, nsample):
    new_t = new_ref[0]                                # (3, TS) f32 centroids
    TS = new_t.shape[1]
    chunk = tri_ref.shape[0]
    N = aug_ref.shape[2]
    nb = N // chunk

    # Augmented query for the fused distance matmul:  d - ||q||^2 = [-2q,1].[p,||p||^2]
    aug_new = jnp.concatenate(
        [-2.0 * new_t,
         jnp.ones((1, TS), jnp.float32),
         jnp.zeros((4, TS), jnp.float32)], axis=0)    # (8, TS)
    q_sq = (new_t[0:1, :] * new_t[0:1, :]
            + new_t[1:2, :] * new_t[1:2, :]
            + new_t[2:3, :] * new_t[2:3, :])          # (1, TS)
    thresh = radius2 - q_sq                           # in-ball iff d-||q||^2 <= thresh

    tri = tri_ref[...]                                # (ck, ck) bf16, lower-tri ones
    dn = (((1,), (0,)), ((), ()))                     # standard (M,K)x(K,N) contraction

    # Blocked inclusive prefix-count ("rank") over the point axis with a carried
    # per-query offset; every slot's one-hot selection row is written while the
    # chunk's d/mask/rank are still live in vregs.
    offset = jnp.zeros((1, TS), jnp.float32)
    for c in range(nb):
        c0 = c * chunk
        pts_c = jnp.transpose(aug_ref[0, :, c0:c0 + chunk])          # (ck, 8) f32
        d_c = lax.dot_general(pts_c, aug_new, dn,
                              preferred_element_type=jnp.float32)    # (ck, TS)
        in_ball = d_c <= thresh
        mask_c = jnp.where(in_ball, 1.0, 0.0).astype(jnp.bfloat16)   # exact 0/1
        rank_c = lax.dot_general(tri, mask_c, dn,
                                 preferred_element_type=jnp.float32) + offset
        offset = rank_c[chunk - 1:chunk, :]           # running in-ball count (1, TS)
        for j in range(nsample):
            hit = jnp.logical_and(in_ball, rank_c == jnp.float32(j + 1))
            sel_ref[c0:c0 + chunk, j * TS:(j + 1) * TS] = (
                jnp.where(hit, 1.0, 0.0).astype(jnp.bfloat16))
    count = offset                                    # (1, TS) total in-ball points

    # One-hot gather on the MXU: three bf16 matmuls against the hi/mid/lo split
    # reconstruct the f32 point/feature values bit-exactly (selection is 0/1).
    sel = sel_ref[...]                                # (N, ns*TS) bf16
    gathered = (
        lax.dot_general(hi_ref[0], sel, dn, preferred_element_type=jnp.float32)
        + lax.dot_general(mid_ref[0], sel, dn, preferred_element_type=jnp.float32)
        + lax.dot_general(lo_ref[0], sel, dn, preferred_element_type=jnp.float32))

    # Slots past `count` are padded with slot 0 (the first in-ball point), as in
    # query_ball_point.  TODO(synk): a fully empty ball (count == 0) is undefined
    # (out-of-range index) in the PyTorch original; this kernel emits zeros.
    g0 = gathered[:, 0:TS]
    pieces = [g0]
    for j in range(1, nsample):
        gj = gathered[:, j * TS:(j + 1) * TS]
        pieces.append(jnp.where(count < jnp.float32(j + 1), g0, gj))
    gathered = jnp.concatenate(pieces, axis=1)        # (F, ns*TS)

    out_ref[0, 0, :, :] = gathered
    # Centroid subtraction on the xyz rows done in-kernel (free VPU slack here).
    cent = jnp.concatenate([new_t] * nsample, axis=1)                 # (3, ns*TS)
    out_ref[0, 0, 0:3, :] = gathered[0:3, :] - cent


def _vmem_capacity_bytes():
    try:
        cap = int(getattr(pltpu.get_tpu_info(), "vmem_capacity_bytes", 0))
        if cap > 0:
            return cap
    except Exception:
        pass
    return 64 * _MIB  # conservative fallback: v7x has 64 MiB per TensorCore


def _pick_chunk(N):
    """Point-chunk width (multiple of 128) and padded point count."""
    n_pad = _round_up(max(N, 1), 128)
    for ck in (512, 384, 256, 128):
        if n_pad % ck == 0:
            return ck, n_pad
    return 128, n_pad  # unreachable: n_pad is a multiple of 128


def _pick_s_tile(S, n_pad, F, nsample, chunk, budget_bytes):
    """Largest query tile TS keeping the *total* resident VMEM under budget."""
    f8 = _round_up(F, 8)
    f16 = _round_up(F, 16)
    fixed = (2 * 8 * n_pad * 4            # aug_pts f32, double-buffered
             + 3 * 2 * f16 * n_pad * 2    # hi/mid/lo bf16, double-buffered
             + 2 * chunk * chunk * 2)     # tri constant
    per_ts = (nsample * n_pad * 2         # sel scratch (bf16)
              + 2 * nsample * f8 * 4      # out block, double-buffered
              + 4 * nsample * f8 * 4      # gathered / pad-fix temporaries
              + 10 * chunk * 4            # chunk-loop temporaries
              + 2 * 8 * 4)                # new_xyz block
    avail = budget_bytes - fixed
    s8 = _round_up(S, 8)
    if s8 <= 128 or (avail >= per_ts * s8 and s8 <= 2048):
        return s8, s8                     # single tile covers every query
    ts = max(avail // per_ts, 128)
    ts = max(128, (ts // 128) * 128)      # lane-aligned: nsample*TS % 128 == 0
    ts = min(int(ts), 2048)
    return ts, _round_up(S, ts)


def query_and_group(xyz, new_xyz, features, *, radius, nsample, s_tile=None):
    """Pallas equivalent of QueryAndGroup.forward -> (B, 3+C, npoint, nsample)."""
    # TODO(synk): features=None branch (xyz-only grouping) not wired up here.
    B, N, _ = xyz.shape
    S = new_xyz.shape[1]
    C = features.shape[1]
    F = 3 + C

    xyz = xyz.astype(jnp.float32)
    new_xyz = new_xyz.astype(jnp.float32)
    features = features.astype(jnp.float32)

    cap = _vmem_capacity_bytes()
    vmem_limit = max(32 * _MIB, int(min(cap - 4 * _MIB, 100 * _MIB)))
    budget = int(vmem_limit * 0.85)

    chunk, n_pad = _pick_chunk(N)
    if s_tile is None:
        TS, s_pad = _pick_s_tile(S, n_pad, F, nsample, chunk, budget)
    else:
        TS = int(s_tile)
        s_pad = _round_up(S, TS)
        assert TS % 8 == 0 and (TS % 128 == 0 or TS == s_pad), (TS, s_pad)
    n_stile = s_pad // TS
    pad_n, pad_s = n_pad - N, s_pad - S

    # --- grid-invariant operands built once in the wrapper -------------------
    xyz_t = jnp.pad(jnp.transpose(xyz, (0, 2, 1)), ((0, 0), (0, 0), (0, pad_n)))
    p_sq = jnp.pad(jnp.sum(xyz * xyz, axis=-1), ((0, 0), (0, pad_n)),
                   constant_values=1e30)  # pad points land outside every ball
    aug_pts = jnp.concatenate(
        [xyz_t, p_sq[:, None, :], jnp.zeros((B, 4, n_pad), jnp.float32)], axis=1)

    pts = jnp.concatenate([jnp.transpose(xyz, (0, 2, 1)), features], axis=1)
    pts = jnp.pad(pts, ((0, 0), (0, 0), (0, pad_n)))          # (B, F, N')
    hi = pts.astype(jnp.bfloat16)                             # exact 3-way split:
    r1 = pts - hi.astype(jnp.float32)                         # hi + mid + lo == pts
    mid = r1.astype(jnp.bfloat16)
    lo = (r1 - mid.astype(jnp.float32)).astype(jnp.bfloat16)

    new_t = jnp.pad(jnp.transpose(new_xyz, (0, 2, 1)),
                    ((0, 0), (0, 0), (0, pad_s)))             # (B, 3, S')

    idx = jnp.arange(chunk)
    tri = (idx[:, None] >= idx[None, :]).astype(jnp.bfloat16)  # inclusive lower-tri

    kernel = functools.partial(_query_and_group_kernel,
                               radius2=float(radius) ** 2, nsample=int(nsample))

    out = pl.pallas_call(
        kernel,
        out_shape=jax.ShapeDtypeStruct((B, n_stile, F, nsample * TS), jnp.float32),
        grid_spec=pltpu.PrefetchScalarGridSpec(
            num_scalar_prefetch=0,
            grid=(B, n_stile),
            in_specs=[
                pl.BlockSpec((1, 3, TS), lambda b, s: (b, 0, s)),
                pl.BlockSpec((1, 8, n_pad), lambda b, s: (b, 0, 0)),
                pl.BlockSpec((1, F, n_pad), lambda b, s: (b, 0, 0)),
                pl.BlockSpec((1, F, n_pad), lambda b, s: (b, 0, 0)),
                pl.BlockSpec((1, F, n_pad), lambda b, s: (b, 0, 0)),
                pl.BlockSpec((chunk, chunk), lambda b, s: (0, 0)),
            ],
            out_specs=pl.BlockSpec((1, 1, F, nsample * TS),
                                   lambda b, s: (b, s, 0, 0)),
            scratch_shapes=[pltpu.VMEM((n_pad, nsample * TS), jnp.bfloat16)],
        ),
        compiler_params=pltpu.CompilerParams(
            dimension_semantics=("parallel", "parallel"),
            vmem_limit_bytes=vmem_limit),
    )(new_t, aug_pts, hi, mid, lo, tri)

    # (B, S'/TS, F, ns*TS) -> (B, F, S, nsample); centroid already subtracted.
    out = out.reshape(B, n_stile, F, nsample, TS)
    out = jnp.transpose(out, (0, 2, 1, 4, 3)).reshape(B, F, s_pad, nsample)
    return out[:, :, :S, :]


def query_and_group_reference(xyz, new_xyz, features, *, radius, nsample):
    """Pure-JAX mirror of the PyTorch module (for verification)."""
    B, N, _ = xyz.shape
    S = new_xyz.shape[1]
    d = (-2.0 * jnp.einsum("bsc,bnc->bsn", new_xyz, xyz)
         + jnp.sum(new_xyz ** 2, -1)[:, :, None]
         + jnp.sum(xyz ** 2, -1)[:, None, :])
    idx = jnp.broadcast_to(jnp.arange(N), (B, S, N))
    idx = jnp.where(d > radius ** 2, N, idx)
    idx = jnp.sort(idx, axis=-1)[:, :, :nsample]
    first = idx[:, :, 0:1]
    idx = jnp.where(idx == N, jnp.broadcast_to(first, idx.shape), idx)

    gather = jax.vmap(lambda p, i: p[i])
    g_xyz = gather(xyz, idx) - new_xyz[:, :, None, :]          # (B, S, ns, 3)
    feats_t = jnp.transpose(features, (0, 2, 1))               # (B, N, C)
    g_feat = gather(feats_t, idx)                              # (B, S, ns, C)
    nf = jnp.concatenate([g_xyz, g_feat], axis=-1)
    return jnp.transpose(nf, (0, 3, 1, 2))                     # (B, 3+C, S, ns)


if __name__ == "__main__":
    B, N, S, C = 2, 16, 8, 4
    radius, nsample = 0.4, 8

    key = jax.random.PRNGKey(0)
    k1, k2 = jax.random.split(key)
    xyz = jax.random.uniform(k1, (B, N, 3), dtype=jnp.float32)
    new_xyz = xyz[:, :S, :]  # centroids are a subset of the points
    features = jax.random.normal(k2, (B, C, N), dtype=jnp.float32)

    out = query_and_group(xyz, new_xyz, features, radius=radius, nsample=nsample)
    out = jax.block_until_ready(out)

    ref = query_and_group_reference(xyz, new_xyz, features,
                                    radius=radius, nsample=nsample)
    assert out.shape == (B, 3 + C, S, nsample), out.shape
    assert jnp.allclose(out, ref, atol=1e-4, rtol=1e-4), (
        float(jnp.max(jnp.abs(out - ref))))
    print("KERNEL_OK")
</pallas_src>

<mosaic_0001>
module attributes {stable_mosaic.version = 11 : i64} {
  func.func @_query_and_group_kernel(%arg0: i32, %arg1: i32, %arg2: memref<1x3x8xf32, #tpu.memory_space<vmem>>, %arg3: memref<1x8x128xf32, #tpu.memory_space<vmem>>, %arg4: memref<1x7x128xbf16, #tpu.memory_space<vmem>>, %arg5: memref<1x7x128xbf16, #tpu.memory_space<vmem>>, %arg6: memref<1x7x128xbf16, #tpu.memory_space<vmem>>, %arg7: memref<128x128xbf16, #tpu.memory_space<vmem>>, %arg8: memref<1x1x7x64xf32, #tpu.memory_space<vmem>>, %arg9: memref<128x64xbf16, #tpu.memory_space<vmem>>) attributes {dimension_semantics = [#tpu.dimension_semantics<parallel>, #tpu.dimension_semantics<parallel>], iteration_bounds = array<i64: 2, 1>, scalar_prefetch = 0 : i64, scratch_operands = 1 : i64, tpu.core_type = #tpu.core_type<tc>, window_params = [{transform_indices = @transform_0, window_bounds = array<i64: 1, 3, 8>}, {transform_indices = @transform_1, window_bounds = array<i64: 1, 8, 128>}, {transform_indices = @transform_2, window_bounds = array<i64: 1, 7, 128>}, {transform_indices = @transform_3, window_bounds = array<i64: 1, 7, 128>}, {transform_indices = @transform_4, window_bounds = array<i64: 1, 7, 128>}, {pipeline_mode = #tpu.pipeline_mode<synchronous>, transform_indices = @transform_5, window_bounds = array<i64: 128, 128>}, {transform_indices = @transform_6, window_bounds = array<i64: 1, 1, 7, 64>}]} {
    %c0 = arith.constant 0 : index
    %c0_0 = arith.constant 0 : index
    %c0_1 = arith.constant 0 : index
    %0 = vector.load %arg2[%c0, %c0_0, %c0_1] : memref<1x3x8xf32, #tpu.memory_space<vmem>>, vector<1x3x8xf32>
    %1 = vector.shape_cast %0 : vector<1x3x8xf32> to vector<3x8xf32>
    %cst = arith.constant -2.000000e+00 : f32
    %2 = vector.broadcast %cst : f32 to vector<3x8xf32>
    %3 = arith.mulf %2, %1 : vector<3x8xf32>
    %cst_2 = arith.constant 1.000000e+00 : f32
    %4 = vector.broadcast %cst_2 : f32 to vector<1x8xf32>
    %cst_3 = arith.constant 0.000000e+00 : f32
    %5 = vector.broadcast %cst_3 : f32 to vector<4x8xf32>
    %6 = tpu.concatenate %3, %4, %5 in 0 : vector<3x8xf32>, vector<1x8xf32>, vector<4x8xf32> -> vector<8x8xf32>
    %7 = vector.extract_strided_slice %1 {offsets = [0, 0], sizes = [1, 8], strides = [1, 1]} : vector<3x8xf32> to vector<1x8xf32>
    %8 = vector.extract_strided_slice %1 {offsets = [0, 0], sizes = [1, 8], strides = [1, 1]} : vector<3x8xf32> to vector<1x8xf32>
    %9 = arith.mulf %7, %8 : vector<1x8xf32>
    %10 = vector.extract_strided_slice %1 {offsets = [1, 0], sizes = [1, 8], strides = [1, 1]} : vector<3x8xf32> to vector<1x8xf32>
    %11 = vector.extract_strided_slice %1 {offsets = [1, 0], sizes = [1, 8], strides = [1, 1]} : vector<3x8xf32> to vector<1x8xf32>
    %12 = arith.mulf %10, %11 : vector<1x8xf32>
    %13 = arith.addf %9, %12 : vector<1x8xf32>
    %14 = vector.extract_strided_slice %1 {offsets = [2, 0], sizes = [1, 8], strides = [1, 1]} : vector<3x8xf32> to vector<1x8xf32>
    %15 = vector.extract_strided_slice %1 {offsets = [2, 0], sizes = [1, 8], strides = [1, 1]} : vector<3x8xf32> to vector<1x8xf32>
    %16 = arith.mulf %14, %15 : vector<1x8xf32>
    %17 = arith.addf %13, %16 : vector<1x8xf32>
    %cst_4 = arith.constant 1.600000e-01 : f32
    %18 = vector.broadcast %cst_4 : f32 to vector<1x8xf32>
    %19 = arith.subf %18, %17 : vector<1x8xf32>
    %c0_5 = arith.constant 0 : index
    %c0_6 = arith.constant 0 : index
    %20 = vector.load %arg7[%c0_5, %c0_6] : memref<128x128xbf16, #tpu.memory_space<vmem>>, vector<128x128xbf16>
    %cst_7 = arith.constant 0.000000e+00 : f32
    %21 = vector.broadcast %cst_7 : f32 to vector<1x8xf32>
    %c0_8 = arith.constant 0 : index
    %c0_9 = arith.constant 0 : index
    %c0_10 = arith.constant 0 : index
    %22 = vector.load %arg3[%c0_8, %c0_9, %c0_10] : memref<1x8x128xf32, #tpu.memory_space<vmem>>, vector<1x8x128xf32>
    %23 = vector.shape_cast %22 : vector<1x8x128xf32> to vector<8x128xf32>
    %24 = tpu.transpose %23, [1, 0] : vector<8x128xf32> -> vector<128x8xf32>
    %cst_11 = arith.constant dense<0.000000e+00> : vector<128x8xf32>
    %25 = tpu.matmul %24, %6, %cst_11 {dimension_numbers = #tpu.dot_dimension_numbers<[1], [0], [0], [1], [0, 0, 1, 1], [], []>} : vector<128x8xf32>, vector<8x8xf32>, vector<128x8xf32> -> vector<128x8xf32>
    %26 = vector.broadcast %19 : vector<1x8xf32> to vector<128x8xf32>
    %27 = arith.cmpf ole, %25, %26 : vector<128x8xf32>
    %cst_12 = arith.constant 1.000000e+00 : f32
    %cst_13 = arith.constant 0.000000e+00 : f32
    %28 = vector.broadcast %cst_12 : f32 to vector<128x8xf32>
    %29 = vector.broadcast %cst_13 : f32 to vector<128x8xf32>
    %30 = arith.select %27, %28, %29 : vector<128x8xi1>, vector<128x8xf32>
    %31 = arith.truncf %30 : vector<128x8xf32> to vector<128x8xbf16>
    %cst_14 = arith.constant dense<0.000000e+00> : vector<128x8xf32>
    %32 = tpu.matmul %20, %31, %cst_14 {dimension_numbers = #tpu.dot_dimension_numbers<[1], [0], [0], [1], [0, 0, 1, 1], [], []>} : vector<128x128xbf16>, vector<128x8xbf16>, vector<128x8xf32> -> vector<128x8xf32>
    %33 = vector.broadcast %21 : vector<1x8xf32> to vector<128x8xf32>
    %34 = arith.addf %32, %33 : vector<128x8xf32>
    %35 = vector.extract_strided_slice %34 {offsets = [127, 0], sizes = [1, 8], strides = [1, 1]} : vector<128x8xf32> to vector<1x8xf32>
    %cst_15 = arith.constant 1.000000e+00 : f32
    %36 = vector.broadcast %cst_15 : f32 to vector<128x8xf32>
    %37 = arith.cmpf oeq, %34, %36 : vector<128x8xf32>
    %38 = arith.andi %27, %37 : vector<128x8xi1>
    %cst_16 = arith.constant 1.000000e+00 : f32
    %cst_17 = arith.constant 0.000000e+00 : f32
    %39 = vector.broadcast %cst_16 : f32 to vector<128x8xf32>
    %40 = vector.broadcast %cst_17 : f32 to vector<128x8xf32>
    %41 = arith.select %38, %39, %40 : vector<128x8xi1>, vector<128x8xf32>
    %42 = arith.truncf %41 : vector<128x8xf32> to vector<128x8xbf16>
    %c0_18 = arith.constant 0 : index
    %c0_19 = arith.constant 0 : index
    %43 = vector.load %arg9[%c0_18, %c0_19] : memref<128x64xbf16, #tpu.memory_space<vmem>>, vector<128x8xbf16>
    tpu.vector_store %arg9[%c0_18, %c0_19], %42 {strides = array<i32>} : memref<128x64xbf16, #tpu.memory_space<vmem>>, vector<128x8xbf16>,
    %cst_20 = arith.constant 2.000000e+00 : f32
    %44 = vector.broadcast %cst_20 : f32 to vector<128x8xf32>
    %45 = arith.cmpf oeq, %34, %44 : vector<128x8xf32>
    %46 = arith.andi %27, %45 : vector<128x8xi1>
    %cst_21 = arith.constant 1.000000e+00 : f32
    %cst_22 = arith.constant 0.000000e+00 : f32
    %47 = vector.broadcast %cst_21 : f32 to vector<128x8xf32>
    %48 = vector.broadcast %cst_22 : f32 to vector<128x8xf32>
    %49 = arith.select %46, %47, %48 : vector<128x8xi1>, vector<128x8xf32>
    %50 = arith.truncf %49 : vector<128x8xf32> to vector<128x8xbf16>
    %c0_23 = arith.constant 0 : index
    %c8 = arith.constant 8 : index
    %51 = vector.load %arg9[%c0_23, %c8] : memref<128x64xbf16, #tpu.memory_space<vmem>>, vector<128x8xbf16>
    tpu.vector_store %arg9[%c0_23, %c8], %50 {strides = array<i32>} : memref<128x64xbf16, #tpu.memory_space<vmem>>, vector<128x8xbf16>,
    %cst_24 = arith.constant 3.000000e+00 : f32
    %52 = vector.broadcast %cst_24 : f32 to vector<128x8xf32>
    %53 = arith.cmpf oeq, %34, %52 : vector<128x8xf32>
    %54 = arith.andi %27, %53 : vector<128x8xi1>
    %cst_25 = arith.constant 1.000000e+00 : f32
    %cst_26 = arith.constant 0.000000e+00 : f32
    %55 = vector.broadcast %cst_25 : f32 to vector<128x8xf32>
    %56 = vector.broadcast %cst_26 : f32 to vector<128x8xf32>
    %57 = arith.select %54, %55, %56 : vector<128x8xi1>, vector<128x8xf32>
    %58 = arith.truncf %57 : vector<128x8xf32> to vector<128x8xbf16>
    %c0_27 = arith.constant 0 : index
    %c16 = arith.constant 16 : index
    %59 = vector.load %arg9[%c0_27, %c16] : memref<128x64xbf16, #tpu.memory_space<vmem>>, vector<128x8xbf16>
    tpu.vector_store %arg9[%c0_27, %c16], %58 {strides = array<i32>} : memref<128x64xbf16, #tpu.memory_space<vmem>>, vector<128x8xbf16>,
    %cst_28 = arith.constant 4.000000e+00 : f32
    %60 = vector.broadcast %cst_28 : f32 to vector<128x8xf32>
    %61 = arith.cmpf oeq, %34, %60 : vector<128x8xf32>
    %62 = arith.andi %27, %61 : vector<128x8xi1>
    %cst_29 = arith.constant 1.000000e+00 : f32
    %cst_30 = arith.constant 0.000000e+00 : f32
    %63 = vector.broadcast %cst_29 : f32 to vector<128x8xf32>
    %64 = vector.broadcast %cst_30 : f32 to vector<128x8xf32>
    %65 = arith.select %62, %63, %64 : vector<128x8xi1>, vector<128x8xf32>
    %66 = arith.truncf %65 : vector<128x8xf32> to vector<128x8xbf16>
    %c0_31 = arith.constant 0 : index
    %c24 = arith.constant 24 : index
    %67 = vector.load %arg9[%c0_31, %c24] : memref<128x64xbf16, #tpu.memory_space<vmem>>, vector<128x8xbf16>
    tpu.vector_store %arg9[%c0_31, %c24], %66 {strides = array<i32>} : memref<128x64xbf16, #tpu.memory_space<vmem>>, vector<128x8xbf16>,
    %cst_32 = arith.constant 5.000000e+00 : f32
    %68 = vector.broadcast %cst_32 : f32 to vector<128x8xf32>
    %69 = arith.cmpf oeq, %34, %68 : vector<128x8xf32>
    %70 = arith.andi %27, %69 : vector<128x8xi1>
    %cst_33 = arith.constant 1.000000e+00 : f32
    %cst_34 = arith.constant 0.000000e+00 : f32
    %71 = vector.broadcast %cst_33 : f32 to vector<128x8xf32>
    %72 = vector.broadcast %cst_34 : f32 to vector<128x8xf32>
    %73 = arith.select %70, %71, %72 : vector<128x8xi1>, vector<128x8xf32>
    %74 = arith.truncf %73 : vector<128x8xf32> to vector<128x8xbf16>
    %c0_35 = arith.constant 0 : index
    %c32 = arith.constant 32 : index
    %75 = vector.load %arg9[%c0_35, %c32] : memref<128x64xbf16, #tpu.memory_space<vmem>>, vector<128x8xbf16>
    tpu.vector_store %arg9[%c0_35, %c32], %74 {strides = array<i32>} : memref<128x64xbf16, #tpu.memory_space<vmem>>, vector<128x8xbf16>,
    %cst_36 = arith.constant 6.000000e+00 : f32
    %76 = vector.broadcast %cst_36 : f32 to vector<128x8xf32>
    %77 = arith.cmpf oeq, %34, %76 : vector<128x8xf32>
    %78 = arith.andi %27, %77 : vector<128x8xi1>
    %cst_37 = arith.constant 1.000000e+00 : f32
    %cst_38 = arith.constant 0.000000e+00 : f32
    %79 = vector.broadcast %cst_37 : f32 to vector<128x8xf32>
    %80 = vector.broadcast %cst_38 : f32 to vector<128x8xf32>
    %81 = arith.select %78, %79, %80 : vector<128x8xi1>, vector<128x8xf32>
    %82 = arith.truncf %81 : vector<128x8xf32> to vector<128x8xbf16>
    %c0_39 = arith.constant 0 : index
    %c40 = arith.constant 40 : index
    %83 = vector.load %arg9[%c0_39, %c40] : memref<128x64xbf16, #tpu.memory_space<vmem>>, vector<128x8xbf16>
    tpu.vector_store %arg9[%c0_39, %c40], %82 {strides = array<i32>} : memref<128x64xbf16, #tpu.memory_space<vmem>>, vector<128x8xbf16>,
    %cst_40 = arith.constant 7.000000e+00 : f32
    %84 = vector.broadcast %cst_40 : f32 to vector<128x8xf32>
    %85 = arith.cmpf oeq, %34, %84 : vector<128x8xf32>
    %86 = arith.andi %27, %85 : vector<128x8xi1>
    %cst_41 = arith.constant 1.000000e+00 : f32
    %cst_42 = arith.constant 0.000000e+00 : f32
    %87 = vector.broadcast %cst_41 : f32 to vector<128x8xf32>
    %88 = vector.broadcast %cst_42 : f32 to vector<128x8xf32>
    %89 = arith.select %86, %87, %88 : vector<128x8xi1>, vector<128x8xf32>
    %90 = arith.truncf %89 : vector<128x8xf32> to vector<128x8xbf16>
    %c0_43 = arith.constant 0 : index
    %c48 = arith.constant 48 : index
    %91 = vector.load %arg9[%c0_43, %c48] : memref<128x64xbf16, #tpu.memory_space<vmem>>, vector<128x8xbf16>
    tpu.vector_store %arg9[%c0_43, %c48], %90 {strides = array<i32>} : memref<128x64xbf16, #tpu.memory_space<vmem>>, vector<128x8xbf16>,
    %cst_44 = arith.constant 8.000000e+00 : f32
    %92 = vector.broadcast %cst_44 : f32 to vector<128x8xf32>
    %93 = arith.cmpf oeq, %34, %92 : vector<128x8xf32>
    %94 = arith.andi %27, %93 : vector<128x8xi1>
    %cst_45 = arith.constant 1.000000e+00 : f32
    %cst_46 = arith.constant 0.000000e+00 : f32
    %95 = vector.broadcast %cst_45 : f32 to vector<128x8xf32>
    %96 = vector.broadcast %cst_46 : f32 to vector<128x8xf32>
    %97 = arith.select %94, %95, %96 : vector<128x8xi1>, vector<128x8xf32>
    %98 = arith.truncf %97 : vector<128x8xf32> to vector<128x8xbf16>
    %c0_47 = arith.constant 0 : index
    %c56 = arith.constant 56 : index
    %99 = vector.load %arg9[%c0_47, %c56] : memref<128x64xbf16, #tpu.memory_space<vmem>>, vector<128x8xbf16>
    tpu.vector_store %arg9[%c0_47, %c56], %98 {strides = array<i32>} : memref<128x64xbf16, #tpu.memory_space<vmem>>, vector<128x8xbf16>,
    %c0_48 = arith.constant 0 : index
    %c0_49 = arith.constant 0 : index
    %100 = vector.load %arg9[%c0_48, %c0_49] : memref<128x64xbf16, #tpu.memory_space<vmem>>, vector<128x64xbf16>
    %c0_50 = arith.constant 0 : index
    %c0_51 = arith.constant 0 : index
    %c0_52 = arith.constant 0 : index
    %101 = vector.load %arg4[%c0_50, %c0_51, %c0_52] : memref<1x7x128xbf16, #tpu.memory_space<vmem>>, vector<1x7x128xbf16>
    %102 = vector.shape_cast %101 : vector<1x7x128xbf16> to vector<7x128xbf16>
    %cst_53 = arith.constant dense<0.000000e+00> : vector<7x64xf32>
    %103 = tpu.matmul %102, %100, %cst_53 {dimension_numbers = #tpu.dot_dimension_numbers<[1], [0], [0], [1], [0, 0, 1, 1], [], []>} : vector<7x128xbf16>, vector<128x64xbf16>, vector<7x64xf32> -> vector<7x64xf32>
    %c0_54 = arith.constant 0 : index
    %c0_55 = arith.constant 0 : index
    %c0_56 = arith.constant 0 : index
    %104 = vector.load %arg5[%c0_54, %c0_55, %c0_56] : memref<1x7x128xbf16, #tpu.memory_space<vmem>>, vector<1x7x128xbf16>
    %105 = vector.shape_cast %104 : vector<1x7x128xbf16> to vector<7x128xbf16>
    %cst_57 = arith.constant dense<0.000000e+00> : vector<7x64xf32>
    %106 = tpu.matmul %105, %100, %cst_57 {dimension_numbers = #tpu.dot_dimension_numbers<[1], [0], [0], [1], [0, 0, 1, 1], [], []>} : vector<7x128xbf16>, vector<128x64xbf16>, vector<7x64xf32> -> vector<7x64xf32>
    %107 = arith.addf %103, %106 : vector<7x64xf32>
    %c0_58 = arith.constant 0 : index
    %c0_59 = arith.constant 0 : index
    %c0_60 = arith.constant 0 : index
    %108 = vector.load %arg6[%c0_58, %c0_59, %c0_60] : memref<1x7x128xbf16, #tpu.memory_space<vmem>>, vector<1x7x128xbf16>
    %109 = vector.shape_cast %108 : vector<1x7x128xbf16> to vector<7x128xbf16>
    %cst_61 = arith.constant dense<0.000000e+00> : vector<7x64xf32>
    %110 = tpu.matmul %109, %100, %cst_61 {dimension_numbers = #tpu.dot_dimension_numbers<[1], [0], [0], [1], [0, 0, 1, 1], [], []>} : vector<7x128xbf16>, vector<128x64xbf16>, vector<7x64xf32> -> vector<7x64xf32>
    %111 = arith.addf %107, %110 : vector<7x64xf32>
    %112 = vector.extract_strided_slice %111 {offsets = [0, 0], sizes = [7, 8], strides = [1, 1]} : vector<7x64xf32> to vector<7x8xf32>
    %113 = vector.extract_strided_slice %111 {offsets = [0, 8], sizes = [7, 8], strides = [1, 1]} : vector<7x64xf32> to vector<7x8xf32>
    %cst_62 = arith.constant 2.000000e+00 : f32
    %114 = vector.broadcast %cst_62 : f32 to vector<1x8xf32>
    %115 = arith.cmpf olt, %35, %114 : vector<1x8xf32>
    %116 = vector.shape_cast %115 : vector<1x8xi1> to vector<1x8xi1>
    %117 = vector.broadcast %116 : vector<1x8xi1> to vector<7x8xi1>
    %118 = arith.select %117, %112, %113 : vector<7x8xi1>, vector<7x8xf32>
    %119 = vector.extract_strided_slice %111 {offsets = [0, 16], sizes = [7, 8], strides = [1, 1]} : vector<7x64xf32> to vector<7x8xf32>
    %cst_63 = arith.constant 3.000000e+00 : f32
    %120 = vector.broadcast %cst_63 : f32 to vector<1x8xf32>
    %121 = arith.cmpf olt, %35, %120 : vector<1x8xf32>
    %122 = vector.shape_cast %121 : vector<1x8xi1> to vector<1x8xi1>
    %123 = vector.broadcast %122 : vector<1x8xi1> to vector<7x8xi1>
    %124 = arith.select %123, %112, %119 : vector<7x8xi1>, vector<7x8xf32>
    %125 = vector.extract_strided_slice %111 {offsets = [0, 24], sizes = [7, 8], strides = [1, 1]} : vector<7x64xf32> to vector<7x8xf32>
    %cst_64 = arith.constant 4.000000e+00 : f32
    %126 = vector.broadcast %cst_64 : f32 to vector<1x8xf32>
    %127 = arith.cmpf olt, %35, %126 : vector<1x8xf32>
    %128 = vector.shape_cast %127 : vector<1x8xi1> to vector<1x8xi1>
    %129 = vector.broadcast %128 : vector<1x8xi1> to vector<7x8xi1>
    %130 = arith.select %129, %112, %125 : vector<7x8xi1>, vector<7x8xf32>
    %131 = vector.extract_strided_slice %111 {offsets = [0, 32], sizes = [7, 8], strides = [1, 1]} : vector<7x64xf32> to vector<7x8xf32>
    %cst_65 = arith.constant 5.000000e+00 : f32
    %132 = vector.broadcast %cst_65 : f32 to vector<1x8xf32>
    %133 = arith.cmpf olt, %35, %132 : vector<1x8xf32>
    %134 = vector.shape_cast %133 : vector<1x8xi1> to vector<1x8xi1>
    %135 = vector.broadcast %134 : vector<1x8xi1> to vector<7x8xi1>
    %136 = arith.select %135, %112, %131 : vector<7x8xi1>, vector<7x8xf32>
    %137 = vector.extract_strided_slice %111 {offsets = [0, 40], sizes = [7, 8], strides = [1, 1]} : vector<7x64xf32> to vector<7x8xf32>
    %cst_66 = arith.constant 6.000000e+00 : f32
    %138 = vector.broadcast %cst_66 : f32 to vector<1x8xf32>
    %139 = arith.cmpf olt, %35, %138 : vector<1x8xf32>
    %140 = vector.shape_cast %139 : vector<1x8xi1> to vector<1x8xi1>
    %141 = vector.broadcast %140 : vector<1x8xi1> to vector<7x8xi1>
    %142 = arith.select %141, %112, %137 : vector<7x8xi1>, vector<7x8xf32>
    %143 = vector.extract_strided_slice %111 {offsets = [0, 48], sizes = [7, 8], strides = [1, 1]} : vector<7x64xf32> to vector<7x8xf32>
    %cst_67 = arith.constant 7.000000e+00 : f32
    %144 = vector.broadcast %cst_67 : f32 to vector<1x8xf32>
    %145 = arith.cmpf olt, %35, %144 : vector<1x8xf32>
    %146 = vector.shape_cast %145 : vector<1x8xi1> to vector<1x8xi1>
    %147 = vector.broadcast %146 : vector<1x8xi1> to vector<7x8xi1>
    %148 = arith.select %147, %112, %143 : vector<7x8xi1>, vector<7x8xf32>
    %149 = vector.extract_strided_slice %111 {offsets = [0, 56], sizes = [7, 8], strides = [1, 1]} : vector<7x64xf32> to vector<7x8xf32>
    %cst_68 = arith.constant 8.000000e+00 : f32
    %150 = vector.broadcast %cst_68 : f32 to vector<1x8xf32>
    %151 = arith.cmpf olt, %35, %150 : vector<1x8xf32>
    %152 = vector.shape_cast %151 : vector<1x8xi1> to vector<1x8xi1>
    %153 = vector.broadcast %152 : vector<1x8xi1> to vector<7x8xi1>
    %154 = arith.select %153, %112, %149 : vector<7x8xi1>, vector<7x8xf32>
    %155 = tpu.concatenate %112, %118, %124, %130, %136, %142, %148, %154 in 1 : vector<7x8xf32>, vector<7x8xf32>, vector<7x8xf32>, vector<7x8xf32>, vector<7x8xf32>, vector<7x8xf32>, vector<7x8xf32>, vector<7x8xf32> -> vector<7x64xf32>
    %c0_69 = arith.constant 0 : index
    %c0_70 = arith.constant 0 : index
    %c0_71 = arith.constant 0 : index
    %c0_72 = arith.constant 0 : index
    %156 = vector.load %arg8[%c0_69, %c0_70, %c0_71, %c0_72] : memref<1x1x7x64xf32, #tpu.memory_space<vmem>>, vector<1x1x7x64xf32>
    %157 = vector.shape_cast %156 : vector<1x1x7x64xf32> to vector<7x64xf32>
    %158 = vector.shape_cast %155 : vector<7x64xf32> to vector<1x1x7x64xf32>
    tpu.vector_store %arg8[%c0_69, %c0_70, %c0_71, %c0_72], %158 {strides = array<i32>} : memref<1x1x7x64xf32, #tpu.memory_space<vmem>>, vector<1x1x7x64xf32>,
    %159 = tpu.concatenate %1, %1, %1, %1, %1, %1, %1, %1 in 1 : vector<3x8xf32>, vector<3x8xf32>, vector<3x8xf32>, vector<3x8xf32>, vector<3x8xf32>, vector<3x8xf32>, vector<3x8xf32>, vector<3x8xf32> -> vector<3x64xf32>
    %160 = vector.extract_strided_slice %155 {offsets = [0, 0], sizes = [3, 64], strides = [1, 1]} : vector<7x64xf32> to vector<3x64xf32>
    %161 = arith.subf %160, %159 : vector<3x64xf32>
    %c0_73 = arith.constant 0 : index
    %c0_74 = arith.constant 0 : index
    %c0_75 = arith.constant 0 : index
    %c0_76 = arith.constant 0 : index
    %162 = vector.load %arg8[%c0_73, %c0_74, %c0_75, %c0_76] : memref<1x1x7x64xf32, #tpu.memory_space<vmem>>, vector<1x1x3x64xf32>
    %163 = vector.shape_cast %162 : vector<1x1x3x64xf32> to vector<3x64xf32>
    %164 = vector.shape_cast %161 : vector<3x64xf32> to vector<1x1x3x64xf32>
    tpu.vector_store %arg8[%c0_73, %c0_74, %c0_75, %c0_76], %164 {strides = array<i32>} : memref<1x1x7x64xf32, #tpu.memory_space<vmem>>, vector<1x1x3x64xf32>,
    return
  }
  func.func @transform_0(%arg0: i32, %arg1: i32) -> (i32, i32, i32) {
    %c0_i32 = arith.constant 0 : i32
    %c0_i32_0 = arith.constant 0 : i32
    return %arg0, %c0_i32, %arg1 : i32, i32, i32
  }
  func.func @transform_1(%arg0: i32, %arg1: i32) -> (i32, i32, i32) {
    %c0_i32 = arith.constant 0 : i32
    %c0_i32_0 = arith.constant 0 : i32
    %c0_i32_1 = arith.constant 0 : i32
    return %arg0, %c0_i32, %c0_i32_0 : i32, i32, i32
  }
  func.func @transform_2(%arg0: i32, %arg1: i32) -> (i32, i32, i32) {
    %c0_i32 = arith.constant 0 : i32
    %c0_i32_0 = arith.constant 0 : i32
    %c0_i32_1 = arith.constant 0 : i32
    return %arg0, %c0_i32, %c0_i32_0 : i32, i32, i32
  }
  func.func @transform_3(%arg0: i32, %arg1: i32) -> (i32, i32, i32) {
    %c0_i32 = arith.constant 0 : i32
    %c0_i32_0 = arith.constant 0 : i32
    %c0_i32_1 = arith.constant 0 : i32
    return %arg0, %c0_i32, %c0_i32_0 : i32, i32, i32
  }
  func.func @transform_4(%arg0: i32, %arg1: i32) -> (i32, i32, i32) {
    %c0_i32 = arith.constant 0 : i32
    %c0_i32_0 = arith.constant 0 : i32
    %c0_i32_1 = arith.constant 0 : i32
    return %arg0, %c0_i32, %c0_i32_0 : i32, i32, i32
  }
  func.func @transform_5(%arg0: i32, %arg1: i32) -> (i32, i32) {
    %c0_i32 = arith.constant 0 : i32
    %c0_i32_0 = arith.constant 0 : i32
    %c0_i32_1 = arith.constant 0 : i32
    return %c0_i32, %c0_i32_0 : i32, i32
  }
  func.func @transform_6(%arg0: i32, %arg1: i32) -> (i32, i32, i32, i32) {
    %c0_i32 = arith.constant 0 : i32
    %c0_i32_0 = arith.constant 0 : i32
    %c0_i32_1 = arith.constant 0 : i32
    return %arg0, %arg1, %c0_i32, %c0_i32_0 : i32, i32, i32, i32
  }
}

</mosaic_0001>

<llo_original>
// kernel: tpu_custom_call.1
$region0: #{tpu_custom_call.1}
  #allocation0 [shape = 'u32[]', space=smem, size = 0x4, offset = 0x4, fixed_abs, tag = 'smem constant byte address 0x4 - core index']
  #allocation1 [shape = 'u32[144,128]{1,0:T(1,128)}', space=vmem, size = 0x12000, scoped, tag = 'internal scratch']
  #allocation2 [shape = 'bf16[128,64]{1,0:T(8,128)(2,1)}', space=vmem, size = 0x8000, scoped, tag = 'scratch operand']
  %s0 = inlined_call_operand.vmem [shape: f32[2,3,8], index: 0, kind: input, shape index: {}]
  %s1 = inlined_call_operand.hbm [shape: f32[2,8,128], index: 1, kind: input, shape index: {}]
  %s2 = inlined_call_operand.vmem [shape: bf16[2,7,128], index: 2, kind: input, shape index: {}]
  %s3 = inlined_call_operand.vmem [shape: bf16[2,7,128], index: 3, kind: input, shape index: {}]
  %s4 = inlined_call_operand.vmem [shape: bf16[2,7,128], index: 4, kind: input, shape index: {}]
  %s5 = inlined_call_operand.vmem [shape: bf16[128,128], index: 5, kind: input, shape index: {}]
  %s6 = inlined_call_operand.vmem [shape: f32[2,1,7,64], index: 6, kind: output, shape index: {}]
  %s7 = sld [smem:[#allocation0]]
  $region61: #{tpu_custom_call.1} parent=0
    _
  %s9 = ssub.s32 1, %s7
  %s10 = scalar_select 0, %s9, %s7
  $region1: #{tpu_custom_call.1} parent=0
    #allocation3 [shape = 'u8[8192]{0}', space=vmem, size = 0x2000, scoped, tag = 'input window, operand 1']
    #allocation4 [shape = 's32[2]{0}', space=sflag, size = 0x8, scoped, tag = 'scoped memory for tpu_custom_call.1']
    %11 = vsyncpa [#allocation4], 0
    %s12 = scalar_lea.sflag [#allocation4], 1
    %13 = vsyncpa %s12, 0
    loop: start=0, step=1, limit=4
    $region2: #{tpu_custom_call.1} parent=1 // loop_pre_header
      _
    $region3: #{tpu_custom_call.1} parent=1 // loop_header
      %s15 = sphi 0, %s19
      %p16 = scmp.ge.s32.totalorder %s15, 4
      %s22 = sphi 0, %s34
      %s23 = sphi 0, %s30
      %s24 = sphi 0, %s22
      %s25 = sphi 0, %s23
      %s26 = sphi 0, %s24
      %s27 = sphi 0, %s25
      %s39 = sphi 0, %s41
      %s42 = sphi 0, %s39
      %s43 = sphi 0, %s42
      %s59 = sphi 0, %s43
      %s65 = sphi 0, %s67
      %s68 = sphi 0, %s65
      %s69 = sphi 0, %s68
      %s85 = sphi 0, %s69
      %s91 = sphi 0, %s93
      %s94 = sphi 0, %s91
      %s95 = sphi 0, %s94
      %s111 = sphi 0, %s95
      %s117 = sphi 0, %s119
      %s120 = sphi 0, %s117
      %s121 = sphi 0, %s120
      %s137 = sphi 0, %s121
      %s143 = sphi 0, %s145
      %s146 = sphi 0, %s143
      %s147 = sphi 0, %s146
      %s163 = sphi 0, %s147
      %s167 = sphi 0, %s167
      %s169 = sphi 0, %s167
      %s170 = sphi 0, %s169
      %s184 = sphi 0, %s170
      %s192 = sphi 0, %s194
      %s195 = sphi 0, %s192
      %s196 = sphi 0, %s195
      %s212 = sphi 0, %s196
    $region4: #{tpu_custom_call.1} parent=1 // loop_header_branch
      %18 = sbr.rel (%p16) target = $region8
    $region5: #{tpu_custom_call.1} parent=1 // loop_body
      %s20 = ssub.s32 %s15, 1
      %s21 = ssub.s32 %s15, 2
      %s28 = sadd.s32 1, %s23
      %p29 = scmp.ge.s32.totalorder %s28, 1
      %s30 = scalar_select %p29, 0, %s28
      %s31 = sadd.s32 1, %s22
      %s32 = scalar_select %p29, %s31, %s22
      %p33 = scmp.ge.s32.totalorder %s32, 2
      %s34 = scalar_select %p33, 0, %s32
      %s35 = ssub.s32 %s22, %s34
      %s36 = ssub.s32 %s23, %s30
      %s37 = sor.u32 %s35, %s36
      %p38 = scmp.eq.s32.totalorder %s37, 0
      %s40 = sadd.s32 %s39, 1
      %s41 = scalar_select %p38, %s39, %s40
      %p44 = pneg %p38
      %p45 = scmp.eq.s32.totalorder %s15, 1
      %p46 = por %p44, %p45
      %p47 = scmp.ne.s32.totalorder %s39, %s42
      %p48 = scmp.eq.s32.totalorder %s15, 0
      %p49 = por %p47, %p48
      %p50 = scmp.ne.s32.totalorder %s39, %s42
      %p51 = scmp.eq.s32.totalorder %s20, 1
      %p52 = por %p50, %p51
      %p53 = scmp.ne.s32.totalorder %s42, %s43
      %p54 = scmp.eq.s32.totalorder %s20, 0
      %p55 = por %p53, %p54
      %p56 = scmp.ne.s32.totalorder %s42, %s43
      %p57 = scmp.eq.s32.totalorder %s21, 1
      %p58 = por %p56, %p57
      %p60 = scmp.ne.s32.totalorder %s43, %s59
      %p61 = scmp.eq.s32.totalorder %s21, 0
      %p62 = por %p60, %p61
      %s63 = ssub.s32 %s22, %s34
      %p64 = scmp.eq.s32.totalorder %s63, 0
      %s66 = sadd.s32 %s65, 1
      %s67 = scalar_select %p64, %s65, %s66
      %p70 = pneg %p64
      %p71 = scmp.eq.s32.totalorder %s15, 1
      %p72 = por %p70, %p71
      %p73 = scmp.ne.s32.totalorder %s65, %s68
      %p74 = scmp.eq.s32.totalorder %s15, 0
      %p75 = por %p73, %p74
      %p76 = scmp.ne.s32.totalorder %s65, %s68
      %p77 = scmp.eq.s32.totalorder %s20, 1
      %p78 = por %p76, %p77
      %p79 = scmp.ne.s32.totalorder %s68, %s69
      %p80 = scmp.eq.s32.totalorder %s20, 0
      %p81 = por %p79, %p80
      %p82 = scmp.ne.s32.totalorder %s68, %s69
      %p83 = scmp.eq.s32.totalorder %s21, 1
      %p84 = por %p82, %p83
      %p86 = scmp.ne.s32.totalorder %s69, %s85
      %p87 = scmp.eq.s32.totalorder %s21, 0
      %p88 = por %p86, %p87
      %s89 = ssub.s32 %s22, %s34
      %p90 = scmp.eq.s32.totalorder %s89, 0
      %s92 = sadd.s32 %s91, 1
      %s93 = scalar_select %p90, %s91, %s92
      %p96 = pneg %p90
      %p97 = scmp.eq.s32.totalorder %s15, 1
      %p98 = por %p96, %p97
      %p99 = scmp.ne.s32.totalorder %s91, %s94
      %p100 = scmp.eq.s32.totalorder %s15, 0
      %p101 = por %p99, %p100
      %p102 = scmp.ne.s32.totalorder %s91, %s94
      %p103 = scmp.eq.s32.totalorder %s20, 1
      %p104 = por %p102, %p103
      %p105 = scmp.ne.s32.totalorder %s94, %s95
      %p106 = scmp.eq.s32.totalorder %s20, 0
      %p107 = por %p105, %p106
      %p108 = scmp.ne.s32.totalorder %s94, %s95
      %p109 = scmp.eq.s32.totalorder %s21, 1
      %p110 = por %p108, %p109
      %p112 = scmp.ne.s32.totalorder %s95, %s111
      %p113 = scmp.eq.s32.totalorder %s21, 0
      %p114 = por %p112, %p113
      %s115 = ssub.s32 %s22, %s34
      %p116 = scmp.eq.s32.totalorder %s115, 0
      %s118 = sadd.s32 %s117, 1
      %s119 = scalar_select %p116, %s117, %s118
      %p122 = pneg %p116
      %p123 = scmp.eq.s32.totalorder %s15, 1
      %p124 = por %p122, %p123
      %p125 = scmp.ne.s32.totalorder %s117, %s120
      %p126 = scmp.eq.s32.totalorder %s15, 0
      %p127 = por %p125, %p126
      %p128 = scmp.ne.s32.totalorder %s117, %s120
      %p129 = scmp.eq.s32.totalorder %s20, 1
      %p130 = por %p128, %p129
      %p131 = scmp.ne.s32.totalorder %s120, %s121
      %p132 = scmp.eq.s32.totalorder %s20, 0
      %p133 = por %p131, %p132
      %p134 = scmp.ne.s32.totalorder %s120, %s121
      %p135 = scmp.eq.s32.totalorder %s21, 1
      %p136 = por %p134, %p135
      %p138 = scmp.ne.s32.totalorder %s121, %s137
      %p139 = scmp.eq.s32.totalorder %s21, 0
      %p140 = por %p138, %p139
      %s141 = ssub.s32 %s22, %s34
      %p142 = scmp.eq.s32.totalorder %s141, 0
      %s144 = sadd.s32 %s143, 1
      %s145 = scalar_select %p142, %s143, %s144
      %p148 = pneg %p142
      %p149 = scmp.eq.s32.totalorder %s15, 1
      %p150 = por %p148, %p149
      %p151 = scmp.ne.s32.totalorder %s143, %s146
      %p152 = scmp.eq.s32.totalorder %s15, 0
      %p153 = por %p151, %p152
      %p154 = scmp.ne.s32.totalorder %s143, %s146
      %p155 = scmp.eq.s32.totalorder %s20, 1
      %p156 = por %p154, %p155
      %p157 = scmp.ne.s32.totalorder %s146, %s147
      %p158 = scmp.eq.s32.totalorder %s20, 0
      %p159 = por %p157, %p158
      %p160 = scmp.ne.s32.totalorder %s146, %s147
      %p161 = scmp.eq.s32.totalorder %s21, 1
      %p162 = por %p160, %p161
      %p164 = scmp.ne.s32.totalorder %s147, %s163
      %p165 = scmp.eq.s32.totalorder %s21, 0
      %p166 = por %p164, %p165
      %s168 = sadd.s32 %s167, 1
      %p171 = scmp.eq.s32.totalorder %s15, 1
      %p172 = scmp.ne.s32.totalorder %s167, %s169
      %p173 = scmp.eq.s32.totalorder %s15, 0
      %p174 = por %p172, %p173
      %p175 = scmp.ne.s32.totalorder %s167, %s169
      %p176 = scmp.eq.s32.totalorder %s20, 1
      %p177 = por %p175, %p176
      %p178 = scmp.ne.s32.totalorder %s169, %s170
      %p179 = scmp.eq.s32.totalorder %s20, 0
      %p180 = por %p178, %p179
      %p181 = scmp.ne.s32.totalorder %s169, %s170
      %p182 = scmp.eq.s32.totalorder %s21, 1
      %p183 = por %p181, %p182
      %p185 = scmp.ne.s32.totalorder %s170, %s184
      %p186 = scmp.eq.s32.totalorder %s21, 0
      %p187 = por %p185, %p186
      %s188 = ssub.s32 %s22, %s34
      %s189 = ssub.s32 %s23, %s30
      %s190 = sor.u32 %s188, %s189
      %p191 = scmp.eq.s32.totalorder %s190, 0
      %s193 = sadd.s32 %s192, 1
      %s194 = scalar_select %p191, %s192, %s193
      %p197 = pneg %p191
      %p198 = scmp.eq.s32.totalorder %s15, 1
      %p199 = por %p197, %p198
      %p200 = scmp.ne.s32.totalorder %s192, %s195
      %p201 = scmp.eq.s32.totalorder %s15, 0
      %p202 = por %p200, %p201
      %p203 = scmp.ne.s32.totalorder %s192, %s195
      %p204 = scmp.eq.s32.totalorder %s20, 1
      %p205 = por %p203, %p204
      %p206 = scmp.ne.s32.totalorder %s195, %s196
      %p207 = scmp.eq.s32.totalorder %s20, 0
      %p208 = por %p206, %p207
      %p209 = scmp.ne.s32.totalorder %s195, %s196
      %p210 = scmp.eq.s32.totalorder %s21, 1
      %p211 = por %p209, %p210
      %p213 = scmp.ne.s32.totalorder %s196, %s212
      %p214 = scmp.eq.s32.totalorder %s21, 0
      %p215 = por %p213, %p214
      %p216 = scmp.le.s32.totalorder 1, %s15
      %p217 = scmp.lt.s32.totalorder %s15, 3
      %p218 = pnand %p216, %p217
      %p219 = pneg %p218
      // Predicated region
      $region9: #{tpu_custom_call.1} parent=5 // pred_check
        _
      $region10: #{tpu_custom_call.1} parent=5 // pred_check_branch
        %221 = sbr.rel (%p218) target = $region12
      $region11: #{tpu_custom_call.1} parent=5 // pred_region
        %s222 = ssub.s32 %s15, 1
        // Predicated region
        $region13: #{tpu_custom_call.1} parent=11 // pred_check
          %p223 = pneg %p180
        $region14: #{tpu_custom_call.1} parent=11 // pred_check_branch
          %225 = sbr.rel (%p223) target = $region16
        $region15: #{tpu_custom_call.1} parent=11 // pred_region
          _
        $region16: #{tpu_custom_call.1} parent=11 // pred_fallthru
          _
      $region12: #{tpu_custom_call.1} parent=5 // pred_fallthru
        _
      %p226 = scmp.lt.s32.totalorder %s15, 2
      // Predicated region
      $region17: #{tpu_custom_call.1} parent=5 // pred_check
        %p227 = pneg %p226
      $region18: #{tpu_custom_call.1} parent=5 // pred_check_branch
        %229 = sbr.rel (%p227) target = $region20
      $region19: #{tpu_custom_call.1} parent=5 // pred_region
        // Predicated region
        $region21: #{tpu_custom_call.1} parent=19 // pred_check
          %p230 = pneg %p49
        $region22: #{tpu_custom_call.1} parent=19 // pred_check_branch
          %232 = sbr.rel (%p230) target = $region24
        $region23: #{tpu_custom_call.1} parent=19 // pred_region
          %p233 = scmp.lt.s32.totalorder %s22, 1
          %s234 = scalar_select %p233, %s22, 1
          %p235 = scmp.lt.s32.totalorder %s23, 0
          %s236 = scalar_select %p235, %s23, 0
          %s237 = sadd.s32 %s236, %s234
          %s238 = smul.addr %s237, 4
          %s239 = scalar_lea.vmem %s0, %s238
        $region24: #{tpu_custom_call.1} parent=19 // pred_fallthru
          _
        // Predicated region
        $region25: #{tpu_custom_call.1} parent=19 // pred_check
          %p240 = pneg %p75
        $region26: #{tpu_custom_call.1} parent=19 // pred_check_branch
          %242 = sbr.rel (%p240) target = $region28
        $region27: #{tpu_custom_call.1} parent=19 // pred_region
          %s243 = sand.u32 %s65, 1
          %s244 = scalar_lea.sflag [#allocation4], %s243
          %s245 = sand.u32 %s65, 1
          %s246 = smul.addr %s245, 8
          %s247 = scalar_lea.vmem [#allocation3], %s246
          %s249 = ssub.s32 128, 128
          %250 = vsyncadd %s244, %s249
          %s251 = smul.addr %s22, 128
          %s252 = scalar_lea.hbm %s1, %s251
          %s254 = sshll.u32 %s247, 4
          %s255 = int_to_ptr.vmem [resolvable:$true] %s254
          %257 = dma.hbm_to_vmem [thread:$0]  %s252, 128, %s255, %s244
        $region28: #{tpu_custom_call.1} parent=19 // pred_fallthru
          _
        // Predicated region
        $region29: #{tpu_custom_call.1} parent=19 // pred_check
          %p258 = pneg %p101
        $region30: #{tpu_custom_call.1} parent=19 // pred_check_branch
          %260 = sbr.rel (%p258) target = $region32
        $region31: #{tpu_custom_call.1} parent=19 // pred_region
          %p261 = scmp.lt.s32.totalorder %s22, 1
          %s262 = scalar_select %p261, %s22, 1
          %s263 = smul.addr %s262, 4
          %s264 = scalar_lea.vmem %s2, %s263
        $region32: #{tpu_custom_call.1} parent=19 // pred_fallthru
          _
        // Predicated region
        $region33: #{tpu_custom_call.1} parent=19 // pred_check
          %p265 = pneg %p127
        $region34: #{tpu_custom_call.1} parent=19 // pred_check_branch
          %267 = sbr.rel (%p265) target = $region36
        $region35: #{tpu_custom_call.1} parent=19 // pred_region
          %p268 = scmp.lt.s32.totalorder %s22, 1
          %s269 = scalar_select %p268, %s22, 1
          %s270 = smul.addr %s269, 4
          %s271 = scalar_lea.vmem %s3, %s270
        $region36: #{tpu_custom_call.1} parent=19 // pred_fallthru
          _
        // Predicated region
        $region37: #{tpu_custom_call.1} parent=19 // pred_check
          %p272 = pneg %p153
        $region38: #{tpu_custom_call.1} parent=19 // pred_check_branch
          %274 = sbr.rel (%p272) target = $region40
        $region39: #{tpu_custom_call.1} parent=19 // pred_region
          %p275 = scmp.lt.s32.totalorder %s22, 1
          %s276 = scalar_select %p275, %s22, 1
          %s277 = smul.addr %s276, 4
          %s278 = scalar_lea.vmem %s4, %s277
        $region40: #{tpu_custom_call.1} parent=19 // pred_fallthru
          _
      $region20: #{tpu_custom_call.1} parent=5 // pred_fallthru
        _
      %p279 = scmp.le.s32.totalorder 1, %s15
      %p280 = scmp.lt.s32.totalorder %s15, 3
      %p281 = pnand %p279, %p280
      %p282 = pneg %p281
      // Predicated region
      $region41: #{tpu_custom_call.1} parent=5 // pred_check
        _
      $region42: #{tpu_custom_call.1} parent=5 // pred_check_branch
        %284 = sbr.rel (%p281) target = $region44
      $region43: #{tpu_custom_call.1} parent=5 // pred_region
        %s285 = ssub.s32 %s15, 1
        %s286 = sand.u32 %s68, 1
        %s287 = scalar_lea.sflag [#allocation4], %s286
        %s288 = sand.u32 %s68, 1
        %s289 = smul.addr %s288, 8
        %s290 = scalar_lea.vmem [#allocation3], %s289
        // Predicated region
        $region45: #{tpu_custom_call.1} parent=43 // pred_check
          %p291 = pneg %p81
        $region46: #{tpu_custom_call.1} parent=43 // pred_check_branch
          %293 = sbr.rel (%p291) target = $region48
        $region47: #{tpu_custom_call.1} parent=43 // pred_region
          %294 = dma.done %s287, 128
        $region48: #{tpu_custom_call.1} parent=43 // pred_fallthru
          _
        %p295 = scmp.lt.s32.totalorder %s24, 1
        %s296 = scalar_select %p295, %s24, 1
        %p297 = scmp.lt.s32.totalorder %s25, 0
        %s298 = scalar_select %p297, %s25, 0
        %s299 = sadd.s32 %s298, %s296
        %s300 = smul.addr %s299, 4
        %s301 = scalar_lea.vmem %s0, %s300
        %p302 = pneg %p55
        %p303 = pneg %p52
        %s304 = sand.u32 %s68, 1
        %s305 = scalar_lea.sflag [#allocation4], %s304
        %s306 = sand.u32 %s68, 1
        %s307 = smul.addr %s306, 8
        %s308 = scalar_lea.vmem [#allocation3], %s307
        %p309 = pneg %p81
        %p310 = pneg %p78
        %p311 = scmp.lt.s32.totalorder %s24, 1
        %s312 = scalar_select %p311, %s24, 1
        %s313 = smul.addr %s312, 4
        %s314 = scalar_lea.vmem %s2, %s313
        %p315 = pneg %p107
        %p316 = pneg %p104
        %p317 = scmp.lt.s32.totalorder %s24, 1
        %s318 = scalar_select %p317, %s24, 1
        %s319 = smul.addr %s318, 4
        %s320 = scalar_lea.vmem %s3, %s319
        %p321 = pneg %p133
        %p322 = pneg %p130
        %p323 = scmp.lt.s32.totalorder %s24, 1
        %s324 = scalar_select %p323, %s24, 1
        %s325 = smul.addr %s324, 4
        %s326 = scalar_lea.vmem %s4, %s325
        %p327 = pneg %p159
        %p328 = pneg %p156
        %p329 = pneg %p180
        %p330 = pneg %p177
        %p331 = pneg %p208
        %p332 = pneg %p205
        %p333 = scmp.lt.s32.totalorder %s24, 1
        %s334 = scalar_select %p333, %s24, 1
        %p335 = scmp.lt.s32.totalorder %s25, 0
        %s336 = scalar_select %p335, %s25, 0
        %s337 = sadd.s32 %s336, %s334
        %s338 = smul.addr %s337, 8
        %s339 = scalar_lea.vmem %s6, %s338
        %p340 = scmp.lt.s32.totalorder %s24, 1
        %s341 = scalar_select %p340, %s24, 1
        %p342 = scmp.lt.s32.totalorder %s25, 0
        %s343 = scalar_select %p342, %s25, 0
        %s344 = sadd.s32 %s343, %s341
        %s345 = smul.addr %s344, 4
        %s346 = scalar_lea.vmem %s0, %s345
        %p347 = scmp.lt.s32.totalorder %s24, 1
        %s348 = scalar_select %p347, %s24, 1
        %s349 = smul.addr %s348, 4
        %s350 = scalar_lea.vmem %s2, %s349
        %p351 = scmp.lt.s32.totalorder %s24, 1
        %s352 = scalar_select %p351, %s24, 1
        %s353 = smul.addr %s352, 4
        %s354 = scalar_lea.vmem %s3, %s353
        %p355 = scmp.lt.s32.totalorder %s24, 1
        %s356 = scalar_select %p355, %s24, 1
        %s357 = smul.addr %s356, 4
        %s358 = scalar_lea.vmem %s4, %s357
        %p359 = scmp.lt.s32.totalorder %s24, 1
        %s360 = scalar_select %p359, %s24, 1
        %p361 = scmp.lt.s32.totalorder %s25, 0
        %s362 = scalar_select %p361, %s25, 0
        %s363 = sadd.s32 %s362, %s360
        %s364 = smul.addr %s363, 8
        %s365 = scalar_lea.vmem %s6, %s364
        %v367 = vld [vmem:[%s346] sm:$0x7]
        %v368 = vmul.f32 %v367, -2.0
        %vm369 = vcmask 1042432
        %v370 = vsel %vm369, %v368, 1.0
        %vm371 = vcmask 1043456
        %v372 = vsel %vm371, %v370, 0.0
        %v373 = vmul.f32 %v367, %v367
        %v375 = vrot.slane %v373, 1
        %v377 = vadd.f32 %v373, %v375
        %v378 = vrot.slane %v373, 2
        %v380 = vadd.f32 %v377, %v378
        %v381 = vsub.f32 0.16, %v380
        %v382 = vld [vmem:[%s5] sm:$0xf]
        %v383 = vld [vmem:[%s5 + $0x4] sm:$0xf]
        %v384 = vld [vmem:[%s5 + $0x8] sm:$0xf]
        %v385 = vld [vmem:[%s5 + $0xc] sm:$0xf]
        %v386 = vld [vmem:[%s5 + $0x10] sm:$0xf]
        %v387 = vld [vmem:[%s5 + $0x14] sm:$0xf]
        %v388 = vld [vmem:[%s5 + $0x18] sm:$0xf]
        %v389 = vld [vmem:[%s5 + $0x1c] sm:$0xf]
        %v390 = vld [vmem:[%s5 + $0x20] sm:$0xf]
        %v391 = vld [vmem:[%s5 + $0x24] sm:$0xf]
        %v392 = vld [vmem:[%s5 + $0x28] sm:$0xf]
        %v393 = vld [vmem:[%s5 + $0x2c] sm:$0xf]
        %v394 = vld [vmem:[%s5 + $0x30] sm:$0xf]
        %v395 = vld [vmem:[%s5 + $0x34] sm:$0xf]
        %v396 = vld [vmem:[%s5 + $0x38] sm:$0xf]
        %v397 = vld [vmem:[%s5 + $0x3c] sm:$0xf]
        %v398 = vld [vmem:[%s290] sm:$0xff]
        %399 = vxpose.xlu0.b32.start [1/16] %v398, 128
        %400 = vxpose.xlu0.b32.cont [2/16] 0.0, 128
        %401 = vxpose.xlu0.b32.cont [3/16] 0.0, 128
        %402 = vxpose.xlu0.b32.cont [4/16] 0.0, 128
        %403 = vxpose.xlu0.b32.cont [5/16] 0.0, 128
        %404 = vxpose.xlu0.b32.cont [6/16] 0.0, 128
        %405 = vxpose.xlu0.b32.cont [7/16] 0.0, 128
        %406 = vxpose.xlu0.b32.cont [8/16] 0.0, 128
        %407 = vxpose.xlu0.b32.cont [9/16] 0.0, 128
        %408 = vxpose.xlu0.b32.cont [10/16] 0.0, 128
        %409 = vxpose.xlu0.b32.cont [11/16] 0.0, 128
        %410 = vxpose.xlu0.b32.cont [12/16] 0.0, 128
        %411 = vxpose.xlu0.b32.cont [13/16] 0.0, 128
        %412 = vxpose.xlu0.b32.cont [14/16] 0.0, 128
        %413 = vxpose.xlu0.b32.cont [15/16] 0.0, 128
        %414 = vxpose.xlu0.b32.end [16/16] 0.0, 128
        %v415 = vpop.trf.xlu0
        %v416 = vpop.trf.xlu0
        %v417 = vpop.trf.xlu0
        %v418 = vpop.trf.xlu0
        %v419 = vpop.trf.xlu0
        %v420 = vpop.trf.xlu0
        %v421 = vpop.trf.xlu0
        %v422 = vpop.trf.xlu0
        %v423 = vpop.trf.xlu0
        %v424 = vpop.trf.xlu0
        %v425 = vpop.trf.xlu0
        %v426 = vpop.trf.xlu0
        %v427 = vpop.trf.xlu0
        %v428 = vpop.trf.xlu0
        %v429 = vpop.trf.xlu0
        %v430 = vpop.trf.xlu0
        %vm431 = vcmask 64512
        %v433 = vsel %vm431, %v415, 0
        %v436 = vsel %vm431, %v416, 0
        %v439 = vsel %vm431, %v417, 0
        %v442 = vsel %vm431, %v418, 0
        %v445 = vsel %vm431, %v419, 0
        %v448 = vsel %vm431, %v420, 0
        %v451 = vsel %vm431, %v421, 0
        %v454 = vsel %vm431, %v422, 0
        %v457 = vsel %vm431, %v423, 0
        %v460 = vsel %vm431, %v424, 0
        %v463 = vsel %vm431, %v425, 0
        %v466 = vsel %vm431, %v426, 0
        %v469 = vsel %vm431, %v427, 0
        %v472 = vsel %vm431, %v428, 0
        %v475 = vsel %vm431, %v429, 0
        %v478 = vsel %vm431, %v430, 0
        %480 = vmatprep.subr.mxu0 0.0
        %481 = vmatpush1.msra.mxu0 0.0
        %482 = vmatprep.subr.mxu0 0.0
        %483 = vmatpush1.msra.mxu0 0.0
        %484 = vmatprep.subr.mxu0 0.0
        %485 = vmatpush1.msra.mxu0 0.0
        %486 = vmatprep.subr.mxu0 0.0
        %487 = vmatpush1.msra.mxu0 0.0
        %488 = vmatprep.subr.mxu0 0.0
        %489 = vmatpush1.msra.mxu0 0.0
        %490 = vmatprep.subr.mxu0 0.0
        %491 = vmatpush1.msra.mxu0 0.0
        %492 = vmatprep.subr.mxu0 0.0
        %493 = vmatpush1.msra.mxu0 0.0
        %494 = vmatprep.subr.mxu0 0.0
        %495 = vmatpush1.msra.mxu0 0.0
        %496 = vmatprep.subr.mxu0 0.0
        %497 = vmatpush1.msra.mxu0 0.0
        %498 = vmatprep.subr.mxu0 0.0
        %499 = vmatpush1.msra.mxu0 0.0
        %500 = vmatprep.subr.mxu0 0.0
        %501 = vmatpush1.msra.mxu0 0.0
        %502 = vmatprep.subr.mxu0 0.0
        %503 = vmatpush1.msra.mxu0 0.0
        %504 = vmatprep.subr.mxu0 0.0
        %505 = vmatpush1.msra.mxu0 0.0
        %506 = vmatprep.subr.mxu0 0.0
        %507 = vmatpush1.msra.mxu0 0.0
        %508 = vmatprep.subr.mxu0 0.0
        %509 = vmatpush1.msra.mxu0 0.0
        %510 = vmatprep.subr.mxu0 0.0
        %511 = vmatpush1.msra.mxu0 %v372
        %512 = vmatprep.subr.mxu0 0.0
        %513 = vmatpush2.msra.mxu0 0.0
        %514 = vmatprep.subr.mxu0 0.0
        %515 = vmatpush2.msra.mxu0 0.0
        %516 = vmatprep.subr.mxu0 0.0
        %517 = vmatpush2.msra.mxu0 0.0
        %518 = vmatprep.subr.mxu0 0.0
        %519 = vmatpush2.msra.mxu0 0.0
        %520 = vmatprep.subr.mxu0 0.0
        %521 = vmatpush2.msra.mxu0 0.0
        %522 = vmatprep.subr.mxu0 0.0
        %523 = vmatpush2.msra.mxu0 0.0
        %524 = vmatprep.subr.mxu0 0.0
        %525 = vmatpush2.msra.mxu0 0.0
        %526 = vmatprep.subr.mxu0 0.0
        %527 = vmatpush2.msra.mxu0 0.0
        %528 = vmatprep.subr.mxu0 0.0
        %529 = vmatpush2.msra.mxu0 0.0
        %530 = vmatprep.subr.mxu0 0.0
        %531 = vmatpush2.msra.mxu0 0.0
        %532 = vmatprep.subr.mxu0 0.0
        %533 = vmatpush2.msra.mxu0 0.0
        %534 = vmatprep.subr.mxu0 0.0
        %535 = vmatpush2.msra.mxu0 0.0
        %536 = vmatprep.subr.mxu0 0.0
        %537 = vmatpush2.msra.mxu0 0.0
        %538 = vmatprep.subr.mxu0 0.0
        %539 = vmatpush2.msra.mxu0 0.0
        %540 = vmatprep.subr.mxu0 0.0
        %541 = vmatpush2.msra.mxu0 0.0
        %542 = vmatprep.subr.mxu0 0.0
        %543 = vmatpush2.msra.mxu0 0.0
        %544 = vmatprep.mubr.f32.mxu0 0.0
        %545 = vmatmul.mubr.f32.gmra.mxu0 %v433
        %v546 = vpop.f32.mrf.mxu0
        %v547 = vadd.f32 0.0, %v546
        %v548 = vpop.f32.mrf.mxu0
        %549 = vmatprep.mubr.f32.mxu0 0.0
        %550 = vmatmul.mubr.f32.gmra.mxu0 %v436
        %v551 = vpop.f32.mrf.mxu0
        %v552 = vadd.f32 0.0, %v551
        %v553 = vpop.f32.mrf.mxu0
        %554 = vmatprep.mubr.f32.mxu0 0.0
        %555 = vmatmul.mubr.f32.gmra.mxu0 %v439
        %v556 = vpop.f32.mrf.mxu0
        %v557 = vadd.f32 0.0, %v556
        %v558 = vpop.f32.mrf.mxu0
        %559 = vmatprep.mubr.f32.mxu0 0.0
        %560 = vmatmul.mubr.f32.gmra.mxu0 %v442
        %v561 = vpop.f32.mrf.mxu0
        %v562 = vadd.f32 0.0, %v561
        %v563 = vpop.f32.mrf.mxu0
        %564 = vmatprep.mubr.f32.mxu0 0.0
        %565 = vmatmul.mubr.f32.gmra.mxu0 %v445
        %v566 = vpop.f32.mrf.mxu0
        %v567 = vadd.f32 0.0, %v566
        %v568 = vpop.f32.mrf.mxu0
        %569 = vmatprep.mubr.f32.mxu0 0.0
        %570 = vmatmul.mubr.f32.gmra.mxu0 %v448
        %v571 = vpop.f32.mrf.mxu0
        %v572 = vadd.f32 0.0, %v571
        %v573 = vpop.f32.mrf.mxu0
        %574 = vmatprep.mubr.f32.mxu0 0.0
        %575 = vmatmul.mubr.f32.gmra.mxu0 %v451
        %v576 = vpop.f32.mrf.mxu0
        %v577 = vadd.f32 0.0, %v576
        %v578 = vpop.f32.mrf.mxu0
        %579 = vmatprep.mubr.f32.mxu0 0.0
        %580 = vmatmul.mubr.f32.gmra.mxu0 %v454
        %v581 = vpop.f32.mrf.mxu0
        %v582 = vadd.f32 0.0, %v581
        %v583 = vpop.f32.mrf.mxu0
        %584 = vmatprep.mubr.f32.mxu0 0.0
        %585 = vmatmul.mubr.f32.gmra.mxu0 %v457
        %v586 = vpop.f32.mrf.mxu0
        %v587 = vadd.f32 0.0, %v586
        %v588 = vpop.f32.mrf.mxu0
        %589 = vmatprep.mubr.f32.mxu0 0.0
        %590 = vmatmul.mubr.f32.gmra.mxu0 %v460
        %v591 = vpop.f32.mrf.mxu0
        %v592 = vadd.f32 0.0, %v591
        %v593 = vpop.f32.mrf.mxu0
        %594 = vmatprep.mubr.f32.mxu0 0.0
        %595 = vmatmul.mubr.f32.gmra.mxu0 %v463
        %v596 = vpop.f32.mrf.mxu0
        %v597 = vadd.f32 0.0, %v596
        %v598 = vpop.f32.mrf.mxu0
        %599 = vmatprep.mubr.f32.mxu0 0.0
        %600 = vmatmul.mubr.f32.gmra.mxu0 %v466
        %v601 = vpop.f32.mrf.mxu0
        %v602 = vadd.f32 0.0, %v601
        %v603 = vpop.f32.mrf.mxu0
        %604 = vmatprep.mubr.f32.mxu0 0.0
        %605 = vmatmul.mubr.f32.gmra.mxu0 %v469
        %v606 = vpop.f32.mrf.mxu0
        %v607 = vadd.f32 0.0, %v606
        %v608 = vpop.f32.mrf.mxu0
        %609 = vmatprep.mubr.f32.mxu0 0.0
        %610 = vmatmul.mubr.f32.gmra.mxu0 %v472
        %v611 = vpop.f32.mrf.mxu0
        %v612 = vadd.f32 0.0, %v611
        %v613 = vpop.f32.mrf.mxu0
        %614 = vmatprep.mubr.f32.mxu0 0.0
        %615 = vmatmul.mubr.f32.gmra.mxu0 %v475
        %v616 = vpop.f32.mrf.mxu0
        %v617 = vadd.f32 0.0, %v616
        %v618 = vpop.f32.mrf.mxu0
        %619 = vmatprep.mubr.f32.mxu0 0.0
        %620 = vmatmul.mubr.f32.gmra.mxu0 %v478
        %v621 = vpop.f32.mrf.mxu0
        %v622 = vadd.f32 0.0, %v621
        %v623 = vpop.f32.mrf.mxu0
        %624 = vdwg.mxu0
        %v625 = vlaneseq
        %v626 = vshrl.u32 %v625, 7
        %v627 = vsub.s32 0, %v626
        %v628 = vrot.slane %v381, %v627
        %vm629 = vcmp.le.f32.partialorder %v547, %v628
        %vm630 = vcmp.le.f32.partialorder %v552, %v628
        %vm631 = vcmp.le.f32.partialorder %v557, %v628
        %vm632 = vcmp.le.f32.partialorder %v562, %v628
        %vm633 = vcmp.le.f32.partialorder %v567, %v628
        %vm634 = vcmp.le.f32.partialorder %v572, %v628
        %vm635 = vcmp.le.f32.partialorder %v577, %v628
        %vm636 = vcmp.le.f32.partialorder %v582, %v628
        %vm637 = vcmp.le.f32.partialorder %v587, %v628
        %vm638 = vcmp.le.f32.partialorder %v592, %v628
        %vm639 = vcmp.le.f32.partialorder %v597, %v628
        %vm640 = vcmp.le.f32.partialorder %v602, %v628
        %vm641 = vcmp.le.f32.partialorder %v607, %v628
        %vm642 = vcmp.le.f32.partialorder %v612, %v628
        %vm643 = vcmp.le.f32.partialorder %v617, %v628
        %vm644 = vcmp.le.f32.partialorder %v622, %v628
        %v645 = vsel %vm629, 1.0, 0.0
        %v646 = vsel %vm630, 1.0, 0.0
        %v647 = vsel %vm631, 1.0, 0.0
        %v648 = vsel %vm632, 1.0, 0.0
        %v649 = vsel %vm633, 1.0, 0.0
        %v650 = vsel %vm634, 1.0, 0.0
        %v651 = vsel %vm635, 1.0, 0.0
        %v652 = vsel %vm636, 1.0, 0.0
        %v653 = vsel %vm637, 1.0, 0.0
        %v654 = vsel %vm638, 1.0, 0.0
        %v655 = vsel %vm639, 1.0, 0.0
        %v656 = vsel %vm640, 1.0, 0.0
        %v657 = vsel %vm641, 1.0, 0.0
        %v658 = vsel %vm642, 1.0, 0.0
        %v659 = vsel %vm643, 1.0, 0.0
        %v660 = vsel %vm644, 1.0, 0.0
        %v661 = vpack.c.bf16 %v646, %v645
        %v662 = vpack.c.bf16 %v648, %v647
        %v663 = vpack.c.bf16 %v650, %v649
        %v664 = vpack.c.bf16 %v652, %v651
        %v665 = vpack.c.bf16 %v654, %v653
        %v666 = vpack.c.bf16 %v656, %v655
        %v667 = vpack.c.bf16 %v658, %v657
        %v668 = vpack.c.bf16 %v660, %v659
        %v685 = vunpack.c.l.b16 %v382
        %v686 = vunpack.c.l.b16 %v383
        %v687 = vunpack.c.l.b16 %v384
        %v688 = vunpack.c.l.b16 %v385
        %v689 = vunpack.c.l.b16 %v386
        %v690 = vunpack.c.l.b16 %v387
        %v691 = vunpack.c.l.b16 %v388
        %v692 = vunpack.c.l.b16 %v389
        %v693 = vunpack.c.l.b16 %v390
        %v694 = vunpack.c.l.b16 %v391
        %v695 = vunpack.c.l.b16 %v392
        %v696 = vunpack.c.l.b16 %v393
        %v697 = vunpack.c.l.b16 %v394
        %v698 = vunpack.c.l.b16 %v395
        %v699 = vunpack.c.l.b16 %v396
        %v700 = vunpack.c.l.b16 %v397
        %v701 = vpack.c.b16 %v686, %v685
        %v702 = vpack.c.b16 %v688, %v687
        %v703 = vpack.c.b16 %v690, %v689
        %v704 = vpack.c.b16 %v692, %v691
        %v705 = vpack.c.b16 %v694, %v693
        %v706 = vpack.c.b16 %v696, %v695
        %v707 = vpack.c.b16 %v698, %v697
        %v708 = vpack.c.b16 %v700, %v699
        %717 = vmatprep.subr.bf16.mxu0 0
        %718 = vmatpush1.bf16.msra.mxu0 %v668
        %719 = vmatprep.subr.bf16.mxu0 0
        %720 = vmatpush1.bf16.msra.mxu0 %v667
        %721 = vmatprep.subr.bf16.mxu0 0
        %722 = vmatpush1.bf16.msra.mxu0 %v666
        %723 = vmatprep.subr.bf16.mxu0 0
        %724 = vmatpush1.bf16.msra.mxu0 %v665
        %725 = vmatprep.subr.bf16.mxu0 0
        %726 = vmatpush1.bf16.msra.mxu0 %v664
        %727 = vmatprep.subr.bf16.mxu0 0
        %728 = vmatpush1.bf16.msra.mxu0 %v663
        %729 = vmatprep.subr.bf16.mxu0 0
        %730 = vmatpush1.bf16.msra.mxu0 %v662
        %731 = vmatprep.subr.bf16.mxu0 0
        %732 = vmatpush1.bf16.msra.mxu0 %v661
        %733 = vmatprep.subr.bf16.mxu0 0
        %734 = vmatpush2.bf16.msra.mxu0 0
        %735 = vmatprep.subr.bf16.mxu0 0
        %736 = vmatpush2.bf16.msra.mxu0 0
        %737 = vmatprep.subr.bf16.mxu0 0
        %738 = vmatpush2.bf16.msra.mxu0 0
        %739 = vmatprep.subr.bf16.mxu0 0
        %740 = vmatpush2.bf16.msra.mxu0 0
        %741 = vmatprep.subr.bf16.mxu0 0
        %742 = vmatpush2.bf16.msra.mxu0 0
        %743 = vmatprep.subr.bf16.mxu0 0
        %744 = vmatpush2.bf16.msra.mxu0 0
        %745 = vmatprep.subr.bf16.mxu0 0
        %746 = vmatpush2.bf16.msra.mxu0 0
        %747 = vmatprep.subr.bf16.mxu0 0
        %748 = vmatpush2.bf16.msra.mxu0 0
        %749 = vmatprep.mubr.bf16.mxu0 0
        %750 = vmatmul.mubr.bf16.gmra.mxu0 %v701
        %v751 = vpop.f32.mrf.mxu0
        %v752 = vadd.f32 0.0, %v751
        %v753 = vpop.f32.mrf.mxu0
        %v754 = vpop.f32.mrf.mxu0
        %v755 = vadd.f32 0.0, %v754
        %v756 = vpop.f32.mrf.mxu0
        %757 = vmatprep.mubr.bf16.mxu0 0
        %758 = vmatmul.mubr.bf16.gmra.mxu0 %v702
        %v759 = vpop.f32.mrf.mxu0
        %v760 = vadd.f32 0.0, %v759
        %v761 = vpop.f32.mrf.mxu0
        %v762 = vpop.f32.mrf.mxu0
        %v763 = vadd.f32 0.0, %v762
        %v764 = vpop.f32.mrf.mxu0
        %765 = vmatprep.mubr.bf16.mxu0 0
        %766 = vmatmul.mubr.bf16.gmra.mxu0 %v703
        %v767 = vpop.f32.mrf.mxu0
        %v768 = vadd.f32 0.0, %v767
        %v769 = vpop.f32.mrf.mxu0
        %v770 = vpop.f32.mrf.mxu0
        %v771 = vadd.f32 0.0, %v770
        %v772 = vpop.f32.mrf.mxu0
        %773 = vmatprep.mubr.bf16.mxu0 0
        %774 = vmatmul.mubr.bf16.gmra.mxu0 %v704
        %v775 = vpop.f32.mrf.mxu0
        %v776 = vadd.f32 0.0, %v775
        %v777 = vpop.f32.mrf.mxu0
        %v778 = vpop.f32.mrf.mxu0
        %v779 = vadd.f32 0.0, %v778
        %v780 = vpop.f32.mrf.mxu0
        %781 = vmatprep.mubr.bf16.mxu0 0
        %782 = vmatmul.mubr.bf16.gmra.mxu0 %v705
        %v783 = vpop.f32.mrf.mxu0
        %v784 = vadd.f32 0.0, %v783
        %v785 = vpop.f32.mrf.mxu0
        %v786 = vpop.f32.mrf.mxu0
        %v787 = vadd.f32 0.0, %v786
        %v788 = vpop.f32.mrf.mxu0
        %789 = vmatprep.mubr.bf16.mxu0 0
        %790 = vmatmul.mubr.bf16.gmra.mxu0 %v706
        %v791 = vpop.f32.mrf.mxu0
        %v792 = vadd.f32 0.0, %v791
        %v793 = vpop.f32.mrf.mxu0
        %v794 = vpop.f32.mrf.mxu0
        %v795 = vadd.f32 0.0, %v794
        %v796 = vpop.f32.mrf.mxu0
        %797 = vmatprep.mubr.bf16.mxu0 0
        %798 = vmatmul.mubr.bf16.gmra.mxu0 %v707
        %v799 = vpop.f32.mrf.mxu0
        %v800 = vadd.f32 0.0, %v799
        %v801 = vpop.f32.mrf.mxu0
        %v802 = vpop.f32.mrf.mxu0
        %v803 = vadd.f32 0.0, %v802
        %v804 = vpop.f32.mrf.mxu0
        %805 = vmatprep.mubr.bf16.mxu0 0
        %806 = vmatmul.mubr.bf16.gmra.mxu0 %v708
        %v807 = vpop.f32.mrf.mxu0
        %v808 = vadd.f32 0.0, %v807
        %v809 = vpop.f32.mrf.mxu0
        %v810 = vpop.f32.mrf.mxu0
        %v811 = vadd.f32 0.0, %v810
        %v812 = vpop.f32.mrf.mxu0
        %813 = vdwg.mxu0
        %vm814 = vcmp.eq.f32.partialorder %v752, 1.0
        %vm815 = vcmp.eq.f32.partialorder %v755, 1.0
        %vm816 = vcmp.eq.f32.partialorder %v760, 1.0
        %vm817 = vcmp.eq.f32.partialorder %v763, 1.0
        %vm818 = vcmp.eq.f32.partialorder %v768, 1.0
        %vm819 = vcmp.eq.f32.partialorder %v771, 1.0
        %vm820 = vcmp.eq.f32.partialorder %v776, 1.0
        %vm821 = vcmp.eq.f32.partialorder %v779, 1.0
        %vm822 = vcmp.eq.f32.partialorder %v784, 1.0
        %vm823 = vcmp.eq.f32.partialorder %v787, 1.0
        %vm824 = vcmp.eq.f32.partialorder %v792, 1.0
        %vm825 = vcmp.eq.f32.partialorder %v795, 1.0
        %vm826 = vcmp.eq.f32.partialorder %v800, 1.0
        %vm827 = vcmp.eq.f32.partialorder %v803, 1.0
        %vm828 = vcmp.eq.f32.partialorder %v808, 1.0
        %vm829 = vcmp.eq.f32.partialorder %v811, 1.0
        %vm830 = vmand %vm629, %vm814
        %vm831 = vmand %vm630, %vm815
        %vm832 = vmand %vm631, %vm816
        %vm833 = vmand %vm632, %vm817
        %vm834 = vmand %vm633, %vm818
        %vm835 = vmand %vm634, %vm819
        %vm836 = vmand %vm635, %vm820
        %vm837 = vmand %vm636, %vm821
        %vm838 = vmand %vm637, %vm822
        %vm839 = vmand %vm638, %vm823
        %vm840 = vmand %vm639, %vm824
        %vm841 = vmand %vm640, %vm825
        %vm842 = vmand %vm641, %vm826
        %vm843 = vmand %vm642, %vm827
        %vm844 = vmand %vm643, %vm828
        %vm845 = vmand %vm644, %vm829
        %v846 = vsel %vm830, 1.0, 0.0
        %v847 = vsel %vm831, 1.0, 0.0
        %v848 = vsel %vm832, 1.0, 0.0
        %v849 = vsel %vm833, 1.0, 0.0
        %v850 = vsel %vm834, 1.0, 0.0
        %v851 = vsel %vm835, 1.0, 0.0
        %v852 = vsel %vm836, 1.0, 0.0
        %v853 = vsel %vm837, 1.0, 0.0
        %v854 = vsel %vm838, 1.0, 0.0
        %v855 = vsel %vm839, 1.0, 0.0
        %v856 = vsel %vm840, 1.0, 0.0
        %v857 = vsel %vm841, 1.0, 0.0
        %v858 = vsel %vm842, 1.0, 0.0
        %v859 = vsel %vm843, 1.0, 0.0
        %v860 = vsel %vm844, 1.0, 0.0
        %v861 = vsel %vm845, 1.0, 0.0
        %v862 = vpack.c.bf16 %v847, %v846
        %v863 = vpack.c.bf16 %v849, %v848
        %v864 = vpack.c.bf16 %v851, %v850
        %v865 = vpack.c.bf16 %v853, %v852
        %v866 = vpack.c.bf16 %v855, %v854
        %v867 = vpack.c.bf16 %v857, %v856
        %v868 = vpack.c.bf16 %v859, %v858
        %v869 = vpack.c.bf16 %v861, %v860
        %v878 = vunpack.c.l.b16 %v862
        %v879 = vunpack.c.h.b16 %v862
        %v880 = vunpack.c.l.b16 %v863
        %v881 = vunpack.c.h.b16 %v863
        %v882 = vunpack.c.l.b16 %v864
        %v883 = vunpack.c.h.b16 %v864
        %v884 = vunpack.c.l.b16 %v865
        %v885 = vunpack.c.h.b16 %v865
        %v886 = vunpack.c.l.b16 %v866
        %v887 = vunpack.c.h.b16 %v866
        %v888 = vunpack.c.l.b16 %v867
        %v889 = vunpack.c.h.b16 %v867
        %v890 = vunpack.c.l.b16 %v868
        %v891 = vunpack.c.h.b16 %v868
        %v892 = vunpack.c.l.b16 %v869
        %v893 = vunpack.c.h.b16 %v869
        %v894 = vpack.c.b16 %v878, %v878
        %v895 = vpack.c.b16 %v879, %v879
        %v896 = vpack.c.b16 %v880, %v880
        %v897 = vpack.c.b16 %v881, %v881
        %v898 = vpack.c.b16 %v882, %v882
        %v899 = vpack.c.b16 %v883, %v883
        %v900 = vpack.c.b16 %v884, %v884
        %v901 = vpack.c.b16 %v885, %v885
        %v902 = vpack.c.b16 %v886, %v886
        %v903 = vpack.c.b16 %v887, %v887
        %v904 = vpack.c.b16 %v888, %v888
        %v905 = vpack.c.b16 %v889, %v889
        %v906 = vpack.c.b16 %v890, %v890
        %v907 = vpack.c.b16 %v891, %v891
        %v908 = vpack.c.b16 %v892, %v892
        %v909 = vpack.c.b16 %v893, %v893
        %vm926 = vcmask 60416
        %927 = vst.msk [vmem:[#allocation2] sm:$0xf] %vm926, %v894
        %928 = vst.msk [vmem:[#allocation2 + $0x4] sm:$0xf] %vm926, %v895
        %929 = vst.msk [vmem:[#allocation2 + $0x8] sm:$0xf] %vm926, %v896
        %930 = vst.msk [vmem:[#allocation2 + $0xc] sm:$0xf] %vm926, %v897
        %931 = vst.msk [vmem:[#allocation2 + $0x10] sm:$0xf] %vm926, %v898
        %932 = vst.msk [vmem:[#allocation2 + $0x14] sm:$0xf] %vm926, %v899
        %933 = vst.msk [vmem:[#allocation2 + $0x18] sm:$0xf] %vm926, %v900
        %934 = vst.msk [vmem:[#allocation2 + $0x1c] sm:$0xf] %vm926, %v901
        %935 = vst.msk [vmem:[#allocation2 + $0x20] sm:$0xf] %vm926, %v902
        %936 = vst.msk [vmem:[#allocation2 + $0x24] sm:$0xf] %vm926, %v903
        %937 = vst.msk [vmem:[#allocation2 + $0x28] sm:$0xf] %vm926, %v904
        %938 = vst.msk [vmem:[#allocation2 + $0x2c] sm:$0xf] %vm926, %v905
        %939 = vst.msk [vmem:[#allocation2 + $0x30] sm:$0xf] %vm926, %v906
        %940 = vst.msk [vmem:[#allocation2 + $0x34] sm:$0xf] %vm926, %v907
        %941 = vst.msk [vmem:[#allocation2 + $0x38] sm:$0xf] %vm926, %v908
        %942 = vst.msk [vmem:[#allocation2 + $0x3c] sm:$0xf] %vm926, %v909
        %vm943 = vcmp.eq.f32.partialorder %v752, 2.0
        %vm944 = vcmp.eq.f32.partialorder %v755, 2.0
        %vm945 = vcmp.eq.f32.partialorder %v760, 2.0
        %vm946 = vcmp.eq.f32.partialorder %v763, 2.0
        %vm947 = vcmp.eq.f32.partialorder %v768, 2.0
        %vm948 = vcmp.eq.f32.partialorder %v771, 2.0
        %vm949 = vcmp.eq.f32.partialorder %v776, 2.0
        %vm950 = vcmp.eq.f32.partialorder %v779, 2.0
        %vm951 = vcmp.eq.f32.partialorder %v784, 2.0
        %vm952 = vcmp.eq.f32.partialorder %v787, 2.0
        %vm953 = vcmp.eq.f32.partialorder %v792, 2.0
        %vm954 = vcmp.eq.f32.partialorder %v795, 2.0
        %vm955 = vcmp.eq.f32.partialorder %v800, 2.0
        %vm956 = vcmp.eq.f32.partialorder %v803, 2.0
        %vm957 = vcmp.eq.f32.partialorder %v808, 2.0
        %vm958 = vcmp.eq.f32.partialorder %v811, 2.0
        %vm959 = vmand %vm629, %vm943
        %vm960 = vmand %vm630, %vm944
        %vm961 = vmand %vm631, %vm945
        %vm962 = vmand %vm632, %vm946
        %vm963 = vmand %vm633, %vm947
        %vm964 = vmand %vm634, %vm948
        %vm965 = vmand %vm635, %vm949
        %vm966 = vmand %vm636, %vm950
        %vm967 = vmand %vm637, %vm951
        %vm968 = vmand %vm638, %vm952
        %vm969 = vmand %vm639, %vm953
        %vm970 = vmand %vm640, %vm954
        %vm971 = vmand %vm641, %vm955
        %vm972 = vmand %vm642, %vm956
        %vm973 = vmand %vm643, %vm957
        %vm974 = vmand %vm644, %vm958
        %v975 = vsel %vm959, 1.0, 0.0
        %v976 = vsel %vm960, 1.0, 0.0
        %v977 = vsel %vm961, 1.0, 0.0
        %v978 = vsel %vm962, 1.0, 0.0
        %v979 = vsel %vm963, 1.0, 0.0
        %v980 = vsel %vm964, 1.0, 0.0
        %v981 = vsel %vm965, 1.0, 0.0
        %v982 = vsel %vm966, 1.0, 0.0
        %v983 = vsel %vm967, 1.0, 0.0
        %v984 = vsel %vm968, 1.0, 0.0
        %v985 = vsel %vm969, 1.0, 0.0
        %v986 = vsel %vm970, 1.0, 0.0
        %v987 = vsel %vm971, 1.0, 0.0
        %v988 = vsel %vm972, 1.0, 0.0
        %v989 = vsel %vm973, 1.0, 0.0
        %v990 = vsel %vm974, 1.0, 0.0
        %v991 = vpack.c.bf16 %v976, %v975
        %v992 = vpack.c.bf16 %v978, %v977
        %v993 = vpack.c.bf16 %v980, %v979
        %v994 = vpack.c.bf16 %v982, %v981
        %v995 = vpack.c.bf16 %v984, %v983
        %v996 = vpack.c.bf16 %v986, %v985
        %v997 = vpack.c.bf16 %v988, %v987
        %v998 = vpack.c.bf16 %v990, %v989
        %v1007 = vunpack.c.l.b16 %v991
        %v1008 = vunpack.c.h.b16 %v991
        %v1009 = vunpack.c.l.b16 %v992
        %v1010 = vunpack.c.h.b16 %v992
        %v1011 = vunpack.c.l.b16 %v993
        %v1012 = vunpack.c.h.b16 %v993
        %v1013 = vunpack.c.l.b16 %v994
        %v1014 = vunpack.c.h.b16 %v994
        %v1015 = vunpack.c.l.b16 %v995
        %v1016 = vunpack.c.h.b16 %v995
        %v1017 = vunpack.c.l.b16 %v996
        %v1018 = vunpack.c.h.b16 %v996
        %v1019 = vunpack.c.l.b16 %v997
        %v1020 = vunpack.c.h.b16 %v997
        %v1021 = vunpack.c.l.b16 %v998
        %v1022 = vunpack.c.h.b16 %v998
        %v1023 = vpack.c.b16 %v1007, %v1007
        %v1024 = vpack.c.b16 %v1008, %v1008
        %v1025 = vpack.c.b16 %v1009, %v1009
        %v1026 = vpack.c.b16 %v1010, %v1010
        %v1027 = vpack.c.b16 %v1011, %v1011
        %v1028 = vpack.c.b16 %v1012, %v1012
        %v1029 = vpack.c.b16 %v1013, %v1013
        %v1030 = vpack.c.b16 %v1014, %v1014
        %v1031 = vpack.c.b16 %v1015, %v1015
        %v1032 = vpack.c.b16 %v1016, %v1016
        %v1033 = vpack.c.b16 %v1017, %v1017
        %v1034 = vpack.c.b16 %v1018, %v1018
        %v1035 = vpack.c.b16 %v1019, %v1019
        %v1036 = vpack.c.b16 %v1020, %v1020
        %v1037 = vpack.c.b16 %v1021, %v1021
        %v1038 = vpack.c.b16 %v1022, %v1022
        %1039 = vrot.lane.b32.xlu0 %v1023, 8
        %v1040 = vpop.permute.xlu0 %1039
        %1041 = vrot.lane.b32.xlu0 %v1024, 8
        %v1042 = vpop.permute.xlu0 %1041
        %1043 = vrot.lane.b32.xlu0 %v1025, 8
        %v1044 = vpop.permute.xlu0 %1043
        %1045 = vrot.lane.b32.xlu0 %v1026, 8
        %v1046 = vpop.permute.xlu0 %1045
        %1047 = vrot.lane.b32.xlu0 %v1027, 8
        %v1048 = vpop.permute.xlu0 %1047
        %1049 = vrot.lane.b32.xlu0 %v1028, 8
        %v1050 = vpop.permute.xlu0 %1049
        %1051 = vrot.lane.b32.xlu0 %v1029, 8
        %v1052 = vpop.permute.xlu0 %1051
        %1053 = vrot.lane.b32.xlu0 %v1030, 8
        %v1054 = vpop.permute.xlu0 %1053
        %1055 = vrot.lane.b32.xlu0 %v1031, 8
        %v1056 = vpop.permute.xlu0 %1055
        %1057 = vrot.lane.b32.xlu0 %v1032, 8
        %v1058 = vpop.permute.xlu0 %1057
        %1059 = vrot.lane.b32.xlu0 %v1033, 8
        %v1060 = vpop.permute.xlu0 %1059
        %1061 = vrot.lane.b32.xlu0 %v1034, 8
        %v1062 = vpop.permute.xlu0 %1061
        %1063 = vrot.lane.b32.xlu0 %v1035, 8
        %v1064 = vpop.permute.xlu0 %1063
        %1065 = vrot.lane.b32.xlu0 %v1036, 8
        %v1066 = vpop.permute.xlu0 %1065
        %1067 = vrot.lane.b32.xlu0 %v1037, 8
        %v1068 = vpop.permute.xlu0 %1067
        %1069 = vrot.lane.b32.xlu0 %v1038, 8
        %v1070 = vpop.permute.xlu0 %1069
        %vm1087 = vcmask 126016
        %1088 = vst.msk [vmem:[#allocation2] sm:$0xf] %vm1087, %v1040
        %1089 = vst.msk [vmem:[#allocation2 + $0x4] sm:$0xf] %vm1087, %v1042
        %1090 = vst.msk [vmem:[#allocation2 + $0x8] sm:$0xf] %vm1087, %v1044
        %1091 = vst.msk [vmem:[#allocation2 + $0xc] sm:$0xf] %vm1087, %v1046
        %1092 = vst.msk [vmem:[#allocation2 + $0x10] sm:$0xf] %vm1087, %v1048
        %1093 = vst.msk [vmem:[#allocation2 + $0x14] sm:$0xf] %vm1087, %v1050
        %1094 = vst.msk [vmem:[#allocation2 + $0x18] sm:$0xf] %vm1087, %v1052
        %1095 = vst.msk [vmem:[#allocation2 + $0x1c] sm:$0xf] %vm1087, %v1054
        %1096 = vst.msk [vmem:[#allocation2 + $0x20] sm:$0xf] %vm1087, %v1056
        %1097 = vst.msk [vmem:[#allocation2 + $0x24] sm:$0xf] %vm1087, %v1058
        %1098 = vst.msk [vmem:[#allocation2 + $0x28] sm:$0xf] %vm1087, %v1060
        %1099 = vst.msk [vmem:[#allocation2 + $0x2c] sm:$0xf] %vm1087, %v1062
        %1100 = vst.msk [vmem:[#allocation2 + $0x30] sm:$0xf] %vm1087, %v1064
        %1101 = vst.msk [vmem:[#allocation2 + $0x34] sm:$0xf] %vm1087, %v1066
        %1102 = vst.msk [vmem:[#allocation2 + $0x38] sm:$0xf] %vm1087, %v1068
        %1103 = vst.msk [vmem:[#allocation2 + $0x3c] sm:$0xf] %vm1087, %v1070
        %vm1104 = vcmp.eq.f32.partialorder %v752, 3.0
        %vm1105 = vcmp.eq.f32.partialorder %v755, 3.0
        %vm1106 = vcmp.eq.f32.partialorder %v760, 3.0
        %vm1107 = vcmp.eq.f32.partialorder %v763, 3.0
        %vm1108 = vcmp.eq.f32.partialorder %v768, 3.0
        %vm1109 = vcmp.eq.f32.partialorder %v771, 3.0
        %vm1110 = vcmp.eq.f32.partialorder %v776, 3.0
        %vm1111 = vcmp.eq.f32.partialorder %v779, 3.0
        %vm1112 = vcmp.eq.f32.partialorder %v784, 3.0
        %vm1113 = vcmp.eq.f32.partialorder %v787, 3.0
        %vm1114 = vcmp.eq.f32.partialorder %v792, 3.0
        %vm1115 = vcmp.eq.f32.partialorder %v795, 3.0
        %vm1116 = vcmp.eq.f32.partialorder %v800, 3.0
        %vm1117 = vcmp.eq.f32.partialorder %v803, 3.0
        %vm1118 = vcmp.eq.f32.partialorder %v808, 3.0
        %vm1119 = vcmp.eq.f32.partialorder %v811, 3.0
        %vm1120 = vmand %vm629, %vm1104
        %vm1121 = vmand %vm630, %vm1105
        %vm1122 = vmand %vm631, %vm1106
        %vm1123 = vmand %vm632, %vm1107
        %vm1124 = vmand %vm633, %vm1108
        %vm1125 = vmand %vm634, %vm1109
        %vm1126 = vmand %vm635, %vm1110
        %vm1127 = vmand %vm636, %vm1111
        %vm1128 = vmand %vm637, %vm1112
        %vm1129 = vmand %vm638, %vm1113
        %vm1130 = vmand %vm639, %vm1114
        %vm1131 = vmand %vm640, %vm1115
        %vm1132 = vmand %vm641, %vm1116
        %vm1133 = vmand %vm642, %vm1117
        %vm1134 = vmand %vm643, %vm1118
        %vm1135 = vmand %vm644, %vm1119
        %v1136 = vsel %vm1120, 1.0, 0.0
        %v1137 = vsel %vm1121, 1.0, 0.0
        %v1138 = vsel %vm1122, 1.0, 0.0
        %v1139 = vsel %vm1123, 1.0, 0.0
        %v1140 = vsel %vm1124, 1.0, 0.0
        %v1141 = vsel %vm1125, 1.0, 0.0
        %v1142 = vsel %vm1126, 1.0, 0.0
        %v1143 = vsel %vm1127, 1.0, 0.0
        %v1144 = vsel %vm1128, 1.0, 0.0
        %v1145 = vsel %vm1129, 1.0, 0.0
        %v1146 = vsel %vm1130, 1.0, 0.0
        %v1147 = vsel %vm1131, 1.0, 0.0
        %v1148 = vsel %vm1132, 1.0, 0.0
        %v1149 = vsel %vm1133, 1.0, 0.0
        %v1150 = vsel %vm1134, 1.0, 0.0
        %v1151 = vsel %vm1135, 1.0, 0.0
        %v1152 = vpack.c.bf16 %v1137, %v1136
        %v1153 = vpack.c.bf16 %v1139, %v1138
        %v1154 = vpack.c.bf16 %v1141, %v1140
        %v1155 = vpack.c.bf16 %v1143, %v1142
        %v1156 = vpack.c.bf16 %v1145, %v1144
        %v1157 = vpack.c.bf16 %v1147, %v1146
        %v1158 = vpack.c.bf16 %v1149, %v1148
        %v1159 = vpack.c.bf16 %v1151, %v1150
        %v1168 = vunpack.c.l.b16 %v1152
        %v1169 = vunpack.c.h.b16 %v1152
        %v1170 = vunpack.c.l.b16 %v1153
        %v1171 = vunpack.c.h.b16 %v1153
        %v1172 = vunpack.c.l.b16 %v1154
        %v1173 = vunpack.c.h.b16 %v1154
        %v1174 = vunpack.c.l.b16 %v1155
        %v1175 = vunpack.c.h.b16 %v1155
        %v1176 = vunpack.c.l.b16 %v1156
        %v1177 = vunpack.c.h.b16 %v1156
        %v1178 = vunpack.c.l.b16 %v1157
        %v1179 = vunpack.c.h.b16 %v1157
        %v1180 = vunpack.c.l.b16 %v1158
        %v1181 = vunpack.c.h.b16 %v1158
        %v1182 = vunpack.c.l.b16 %v1159
        %v1183 = vunpack.c.h.b16 %v1159
        %v1184 = vpack.c.b16 %v1168, %v1168
        %v1185 = vpack.c.b16 %v1169, %v1169
        %v1186 = vpack.c.b16 %v1170, %v1170
        %v1187 = vpack.c.b16 %v1171, %v1171
        %v1188 = vpack.c.b16 %v1172, %v1172
        %v1189 = vpack.c.b16 %v1173, %v1173
        %v1190 = vpack.c.b16 %v1174, %v1174
        %v1191 = vpack.c.b16 %v1175, %v1175
        %v1192 = vpack.c.b16 %v1176, %v1176
        %v1193 = vpack.c.b16 %v1177, %v1177
        %v1194 = vpack.c.b16 %v1178, %v1178
        %v1195 = vpack.c.b16 %v1179, %v1179
        %v1196 = vpack.c.b16 %v1180, %v1180
        %v1197 = vpack.c.b16 %v1181, %v1181
        %v1198 = vpack.c.b16 %v1182, %v1182
        %v1199 = vpack.c.b16 %v1183, %v1183
        %1200 = vrot.lane.b32.xlu0 %v1184, 16
        %v1201 = vpop.permute.xlu0 %1200
        %1202 = vrot.lane.b32.xlu0 %v1185, 16
        %v1203 = vpop.permute.xlu0 %1202
        %1204 = vrot.lane.b32.xlu0 %v1186, 16
        %v1205 = vpop.permute.xlu0 %1204
        %1206 = vrot.lane.b32.xlu0 %v1187, 16
        %v1207 = vpop.permute.xlu0 %1206
        %1208 = vrot.lane.b32.xlu0 %v1188, 16
        %v1209 = vpop.permute.xlu0 %1208
        %1210 = vrot.lane.b32.xlu0 %v1189, 16
        %v1211 = vpop.permute.xlu0 %1210
        %1212 = vrot.lane.b32.xlu0 %v1190, 16
        %v1213 = vpop.permute.xlu0 %1212
        %1214 = vrot.lane.b32.xlu0 %v1191, 16
        %v1215 = vpop.permute.xlu0 %1214
        %1216 = vrot.lane.b32.xlu0 %v1192, 16
        %v1217 = vpop.permute.xlu0 %1216
        %1218 = vrot.lane.b32.xlu0 %v1193, 16
        %v1219 = vpop.permute.xlu0 %1218
        %1220 = vrot.lane.b32.xlu0 %v1194, 16
        %v1221 = vpop.permute.xlu0 %1220
        %1222 = vrot.lane.b32.xlu0 %v1195, 16
        %v1223 = vpop.permute.xlu0 %1222
        %1224 = vrot.lane.b32.xlu0 %v1196, 16
        %v1225 = vpop.permute.xlu0 %1224
        %1226 = vrot.lane.b32.xlu0 %v1197, 16
        %v1227 = vpop.permute.xlu0 %1226
        %1228 = vrot.lane.b32.xlu0 %v1198, 16
        %v1229 = vpop.permute.xlu0 %1228
        %1230 = vrot.lane.b32.xlu0 %v1199, 16
        %v1231 = vpop.permute.xlu0 %1230
        %vm1248 = vcmask 191616
        %1249 = vst.msk [vmem:[#allocation2] sm:$0xf] %vm1248, %v1201
        %1250 = vst.msk [vmem:[#allocation2 + $0x4] sm:$0xf] %vm1248, %v1203
        %1251 = vst.msk [vmem:[#allocation2 + $0x8] sm:$0xf] %vm1248, %v1205
        %1252 = vst.msk [vmem:[#allocation2 + $0xc] sm:$0xf] %vm1248, %v1207
        %1253 = vst.msk [vmem:[#allocation2 + $0x10] sm:$0xf] %vm1248, %v1209
        %1254 = vst.msk [vmem:[#allocation2 + $0x14] sm:$0xf] %vm1248, %v1211
        %1255 = vst.msk [vmem:[#allocation2 + $0x18] sm:$0xf] %vm1248, %v1213
        %1256 = vst.msk [vmem:[#allocation2 + $0x1c] sm:$0xf] %vm1248, %v1215
        %1257 = vst.msk [vmem:[#allocation2 + $0x20] sm:$0xf] %vm1248, %v1217
        %1258 = vst.msk [vmem:[#allocation2 + $0x24] sm:$0xf] %vm1248, %v1219
        %1259 = vst.msk [vmem:[#allocation2 + $0x28] sm:$0xf] %vm1248, %v1221
        %1260 = vst.msk [vmem:[#allocation2 + $0x2c] sm:$0xf] %vm1248, %v1223
        %1261 = vst.msk [vmem:[#allocation2 + $0x30] sm:$0xf] %vm1248, %v1225
        %1262 = vst.msk [vmem:[#allocation2 + $0x34] sm:$0xf] %vm1248, %v1227
        %1263 = vst.msk [vmem:[#allocation2 + $0x38] sm:$0xf] %vm1248, %v1229
        %1264 = vst.msk [vmem:[#allocation2 + $0x3c] sm:$0xf] %vm1248, %v1231
        %vm1265 = vcmp.eq.f32.partialorder %v752, 4.0
        %vm1266 = vcmp.eq.f32.partialorder %v755, 4.0
        %vm1267 = vcmp.eq.f32.partialorder %v760, 4.0
        %vm1268 = vcmp.eq.f32.partialorder %v763, 4.0
        %vm1269 = vcmp.eq.f32.partialorder %v768, 4.0
        %vm1270 = vcmp.eq.f32.partialorder %v771, 4.0
        %vm1271 = vcmp.eq.f32.partialorder %v776, 4.0
        %vm1272 = vcmp.eq.f32.partialorder %v779, 4.0
        %vm1273 = vcmp.eq.f32.partialorder %v784, 4.0
        %vm1274 = vcmp.eq.f32.partialorder %v787, 4.0
        %vm1275 = vcmp.eq.f32.partialorder %v792, 4.0
        %vm1276 = vcmp.eq.f32.partialorder %v795, 4.0
        %vm1277 = vcmp.eq.f32.partialorder %v800, 4.0
        %vm1278 = vcmp.eq.f32.partialorder %v803, 4.0
        %vm1279 = vcmp.eq.f32.partialorder %v808, 4.0
        %vm1280 = vcmp.eq.f32.partialorder %v811, 4.0
        %vm1281 = vmand %vm629, %vm1265
        %vm1282 = vmand %vm630, %vm1266
        %vm1283 = vmand %vm631, %vm1267
        %vm1284 = vmand %vm632, %vm1268
        %vm1285 = vmand %vm633, %vm1269
        %vm1286 = vmand %vm634, %vm1270
        %vm1287 = vmand %vm635, %vm1271
        %vm1288 = vmand %vm636, %vm1272
        %vm1289 = vmand %vm637, %vm1273
        %vm1290 = vmand %vm638, %vm1274
        %vm1291 = vmand %vm639, %vm1275
        %vm1292 = vmand %vm640, %vm1276
        %vm1293 = vmand %vm641, %vm1277
        %vm1294 = vmand %vm642, %vm1278
        %vm1295 = vmand %vm643, %vm1279
        %vm1296 = vmand %vm644, %vm1280
        %v1297 = vsel %vm1281, 1.0, 0.0
        %v1298 = vsel %vm1282, 1.0, 0.0
        %v1299 = vsel %vm1283, 1.0, 0.0
        %v1300 = vsel %vm1284, 1.0, 0.0
        %v1301 = vsel %vm1285, 1.0, 0.0
        %v1302 = vsel %vm1286, 1.0, 0.0
        %v1303 = vsel %vm1287, 1.0, 0.0
        %v1304 = vsel %vm1288, 1.0, 0.0
        %v1305 = vsel %vm1289, 1.0, 0.0
        %v1306 = vsel %vm1290, 1.0, 0.0
        %v1307 = vsel %vm1291, 1.0, 0.0
        %v1308 = vsel %vm1292, 1.0, 0.0
        %v1309 = vsel %vm1293, 1.0, 0.0
        %v1310 = vsel %vm1294, 1.0, 0.0
        %v1311 = vsel %vm1295, 1.0, 0.0
        %v1312 = vsel %vm1296, 1.0, 0.0
        %v1313 = vpack.c.bf16 %v1298, %v1297
        %v1314 = vpack.c.bf16 %v1300, %v1299
        %v1315 = vpack.c.bf16 %v1302, %v1301
        %v1316 = vpack.c.bf16 %v1304, %v1303
        %v1317 = vpack.c.bf16 %v1306, %v1305
        %v1318 = vpack.c.bf16 %v1308, %v1307
        %v1319 = vpack.c.bf16 %v1310, %v1309
        %v1320 = vpack.c.bf16 %v1312, %v1311
        %v1329 = vunpack.c.l.b16 %v1313
        %v1330 = vunpack.c.h.b16 %v1313
        %v1331 = vunpack.c.l.b16 %v1314
        %v1332 = vunpack.c.h.b16 %v1314
        %v1333 = vunpack.c.l.b16 %v1315
        %v1334 = vunpack.c.h.b16 %v1315
        %v1335 = vunpack.c.l.b16 %v1316
        %v1336 = vunpack.c.h.b16 %v1316
        %v1337 = vunpack.c.l.b16 %v1317
        %v1338 = vunpack.c.h.b16 %v1317
        %v1339 = vunpack.c.l.b16 %v1318
        %v1340 = vunpack.c.h.b16 %v1318
        %v1341 = vunpack.c.l.b16 %v1319
        %v1342 = vunpack.c.h.b16 %v1319
        %v1343 = vunpack.c.l.b16 %v1320
        %v1344 = vunpack.c.h.b16 %v1320
        %v1345 = vpack.c.b16 %v1329, %v1329
        %v1346 = vpack.c.b16 %v1330, %v1330
        %v1347 = vpack.c.b16 %v1331, %v1331
        %v1348 = vpack.c.b16 %v1332, %v1332
        %v1349 = vpack.c.b16 %v1333, %v1333
        %v1350 = vpack.c.b16 %v1334, %v1334
        %v1351 = vpack.c.b16 %v1335, %v1335
        %v1352 = vpack.c.b16 %v1336, %v1336
        %v1353 = vpack.c.b16 %v1337, %v1337
        %v1354 = vpack.c.b16 %v1338, %v1338
        %v1355 = vpack.c.b16 %v1339, %v1339
        %v1356 = vpack.c.b16 %v1340, %v1340
        %v1357 = vpack.c.b16 %v1341, %v1341
        %v1358 = vpack.c.b16 %v1342, %v1342
        %v1359 = vpack.c.b16 %v1343, %v1343
        %v1360 = vpack.c.b16 %v1344, %v1344
        %1361 = vrot.lane.b32.xlu0 %v1345, 24
        %v1362 = vpop.permute.xlu0 %1361
        %1363 = vrot.lane.b32.xlu0 %v1346, 24
        %v1364 = vpop.permute.xlu0 %1363
        %1365 = vrot.lane.b32.xlu0 %v1347, 24
        %v1366 = vpop.permute.xlu0 %1365
        %1367 = vrot.lane.b32.xlu0 %v1348, 24
        %v1368 = vpop.permute.xlu0 %1367
        %1369 = vrot.lane.b32.xlu0 %v1349, 24
        %v1370 = vpop.permute.xlu0 %1369
        %1371 = vrot.lane.b32.xlu0 %v1350, 24
        %v1372 = vpop.permute.xlu0 %1371
        %1373 = vrot.lane.b32.xlu0 %v1351, 24
        %v1374 = vpop.permute.xlu0 %1373
        %1375 = vrot.lane.b32.xlu0 %v1352, 24
        %v1376 = vpop.permute.xlu0 %1375
        %1377 = vrot.lane.b32.xlu0 %v1353, 24
        %v1378 = vpop.permute.xlu0 %1377
        %1379 = vrot.lane.b32.xlu0 %v1354, 24
        %v1380 = vpop.permute.xlu0 %1379
        %1381 = vrot.lane.b32.xlu0 %v1355, 24
        %v1382 = vpop.permute.xlu0 %1381
        %1383 = vrot.lane.b32.xlu0 %v1356, 24
        %v1384 = vpop.permute.xlu0 %1383
        %1385 = vrot.lane.b32.xlu0 %v1357, 24
        %v1386 = vpop.permute.xlu0 %1385
        %1387 = vrot.lane.b32.xlu0 %v1358, 24
        %v1388 = vpop.permute.xlu0 %1387
        %1389 = vrot.lane.b32.xlu0 %v1359, 24
        %v1390 = vpop.permute.xlu0 %1389
        %1391 = vrot.lane.b32.xlu0 %v1360, 24
        %v1392 = vpop.permute.xlu0 %1391
        %vm1409 = vcmask 257216
        %1410 = vst.msk [vmem:[#allocation2] sm:$0xf] %vm1409, %v1362
        %1411 = vst.msk [vmem:[#allocation2 + $0x4] sm:$0xf] %vm1409, %v1364
        %1412 = vst.msk [vmem:[#allocation2 + $0x8] sm:$0xf] %vm1409, %v1366
        %1413 = vst.msk [vmem:[#allocation2 + $0xc] sm:$0xf] %vm1409, %v1368
        %1414 = vst.msk [vmem:[#allocation2 + $0x10] sm:$0xf] %vm1409, %v1370
        %1415 = vst.msk [vmem:[#allocation2 + $0x14] sm:$0xf] %vm1409, %v1372
        %1416 = vst.msk [vmem:[#allocation2 + $0x18] sm:$0xf] %vm1409, %v1374
        %1417 = vst.msk [vmem:[#allocation2 + $0x1c] sm:$0xf] %vm1409, %v1376
        %1418 = vst.msk [vmem:[#allocation2 + $0x20] sm:$0xf] %vm1409, %v1378
        %1419 = vst.msk [vmem:[#allocation2 + $0x24] sm:$0xf] %vm1409, %v1380
        %1420 = vst.msk [vmem:[#allocation2 + $0x28] sm:$0xf] %vm1409, %v1382
        %1421 = vst.msk [vmem:[#allocation2 + $0x2c] sm:$0xf] %vm1409, %v1384
        %1422 = vst.msk [vmem:[#allocation2 + $0x30] sm:$0xf] %vm1409, %v1386
        %1423 = vst.msk [vmem:[#allocation2 + $0x34] sm:$0xf] %vm1409, %v1388
        %1424 = vst.msk [vmem:[#allocation2 + $0x38] sm:$0xf] %vm1409, %v1390
        %1425 = vst.msk [vmem:[#allocation2 + $0x3c] sm:$0xf] %vm1409, %v1392
        %vm1426 = vcmp.eq.f32.partialorder %v752, 5.0
        %vm1427 = vcmp.eq.f32.partialorder %v755, 5.0
        %vm1428 = vcmp.eq.f32.partialorder %v760, 5.0
        %vm1429 = vcmp.eq.f32.partialorder %v763, 5.0
        %vm1430 = vcmp.eq.f32.partialorder %v768, 5.0
        %vm1431 = vcmp.eq.f32.partialorder %v771, 5.0
        %vm1432 = vcmp.eq.f32.partialorder %v776, 5.0
        %vm1433 = vcmp.eq.f32.partialorder %v779, 5.0
        %vm1434 = vcmp.eq.f32.partialorder %v784, 5.0
        %vm1435 = vcmp.eq.f32.partialorder %v787, 5.0
        %vm1436 = vcmp.eq.f32.partialorder %v792, 5.0
        %vm1437 = vcmp.eq.f32.partialorder %v795, 5.0
        %vm1438 = vcmp.eq.f32.partialorder %v800, 5.0
        %vm1439 = vcmp.eq.f32.partialorder %v803, 5.0
        %vm1440 = vcmp.eq.f32.partialorder %v808, 5.0
        %vm1441 = vcmp.eq.f32.partialorder %v811, 5.0
        %vm1442 = vmand %vm629, %vm1426
        %vm1443 = vmand %vm630, %vm1427
        %vm1444 = vmand %vm631, %vm1428
        %vm1445 = vmand %vm632, %vm1429
        %vm1446 = vmand %vm633, %vm1430
        %vm1447 = vmand %vm634, %vm1431
        %vm1448 = vmand %vm635, %vm1432
        %vm1449 = vmand %vm636, %vm1433
        %vm1450 = vmand %vm637, %vm1434
        %vm1451 = vmand %vm638, %vm1435
        %vm1452 = vmand %vm639, %vm1436
        %vm1453 = vmand %vm640, %vm1437
        %vm1454 = vmand %vm641, %vm1438
        %vm1455 = vmand %vm642, %vm1439
        %vm1456 = vmand %vm643, %vm1440
        %vm1457 = vmand %vm644, %vm1441
        %v1458 = vsel %vm1442, 1.0, 0.0
        %v1459 = vsel %vm1443, 1.0, 0.0
        %v1460 = vsel %vm1444, 1.0, 0.0
        %v1461 = vsel %vm1445, 1.0, 0.0
        %v1462 = vsel %vm1446, 1.0, 0.0
        %v1463 = vsel %vm1447, 1.0, 0.0
        %v1464 = vsel %vm1448, 1.0, 0.0
        %v1465 = vsel %vm1449, 1.0, 0.0
        %v1466 = vsel %vm1450, 1.0, 0.0
        %v1467 = vsel %vm1451, 1.0, 0.0
        %v1468 = vsel %vm1452, 1.0, 0.0
        %v1469 = vsel %vm1453, 1.0, 0.0
        %v1470 = vsel %vm1454, 1.0, 0.0
        %v1471 = vsel %vm1455, 1.0, 0.0
        %v1472 = vsel %vm1456, 1.0, 0.0
        %v1473 = vsel %vm1457, 1.0, 0.0
        %v1474 = vpack.c.bf16 %v1459, %v1458
        %v1475 = vpack.c.bf16 %v1461, %v1460
        %v1476 = vpack.c.bf16 %v1463, %v1462
        %v1477 = vpack.c.bf16 %v1465, %v1464
        %v1478 = vpack.c.bf16 %v1467, %v1466
        %v1479 = vpack.c.bf16 %v1469, %v1468
        %v1480 = vpack.c.bf16 %v1471, %v1470
        %v1481 = vpack.c.bf16 %v1473, %v1472
        %v1490 = vunpack.c.l.b16 %v1474
        %v1491 = vunpack.c.h.b16 %v1474
        %v1492 = vunpack.c.l.b16 %v1475
        %v1493 = vunpack.c.h.b16 %v1475
        %v1494 = vunpack.c.l.b16 %v1476
        %v1495 = vunpack.c.h.b16 %v1476
        %v1496 = vunpack.c.l.b16 %v1477
        %v1497 = vunpack.c.h.b16 %v1477
        %v1498 = vunpack.c.l.b16 %v1478
        %v1499 = vunpack.c.h.b16 %v1478
        %v1500 = vunpack.c.l.b16 %v1479
        %v1501 = vunpack.c.h.b16 %v1479
        %v1502 = vunpack.c.l.b16 %v1480
        %v1503 = vunpack.c.h.b16 %v1480
        %v1504 = vunpack.c.l.b16 %v1481
        %v1505 = vunpack.c.h.b16 %v1481
        %v1506 = vpack.c.b16 %v1490, %v1490
        %v1507 = vpack.c.b16 %v1491, %v1491
        %v1508 = vpack.c.b16 %v1492, %v1492
        %v1509 = vpack.c.b16 %v1493, %v1493
        %v1510 = vpack.c.b16 %v1494, %v1494
        %v1511 = vpack.c.b16 %v1495, %v1495
        %v1512 = vpack.c.b16 %v1496, %v1496
        %v1513 = vpack.c.b16 %v1497, %v1497
        %v1514 = vpack.c.b16 %v1498, %v1498
        %v1515 = vpack.c.b16 %v1499, %v1499
        %v1516 = vpack.c.b16 %v1500, %v1500
        %v1517 = vpack.c.b16 %v1501, %v1501
        %v1518 = vpack.c.b16 %v1502, %v1502
        %v1519 = vpack.c.b16 %v1503, %v1503
        %v1520 = vpack.c.b16 %v1504, %v1504
        %v1521 = vpack.c.b16 %v1505, %v1505
        %1522 = vrot.lane.b32.xlu0 %v1506, 32
        %v1523 = vpop.permute.xlu0 %1522
        %1524 = vrot.lane.b32.xlu0 %v1507, 32
        %v1525 = vpop.permute.xlu0 %1524
        %1526 = vrot.lane.b32.xlu0 %v1508, 32
        %v1527 = vpop.permute.xlu0 %1526
        %1528 = vrot.lane.b32.xlu0 %v1509, 32
        %v1529 = vpop.permute.xlu0 %1528
        %1530 = vrot.lane.b32.xlu0 %v1510, 32
        %v1531 = vpop.permute.xlu0 %1530
        %1532 = vrot.lane.b32.xlu0 %v1511, 32
        %v1533 = vpop.permute.xlu0 %1532
        %1534 = vrot.lane.b32.xlu0 %v1512, 32
        %v1535 = vpop.permute.xlu0 %1534
        %1536 = vrot.lane.b32.xlu0 %v1513, 32
        %v1537 = vpop.permute.xlu0 %1536
        %1538 = vrot.lane.b32.xlu0 %v1514, 32
        %v1539 = vpop.permute.xlu0 %1538
        %1540 = vrot.lane.b32.xlu0 %v1515, 32
        %v1541 = vpop.permute.xlu0 %1540
        %1542 = vrot.lane.b32.xlu0 %v1516, 32
        %v1543 = vpop.permute.xlu0 %1542
        %1544 = vrot.lane.b32.xlu0 %v1517, 32
        %v1545 = vpop.permute.xlu0 %1544
        %1546 = vrot.lane.b32.xlu0 %v1518, 32
        %v1547 = vpop.permute.xlu0 %1546
        %1548 = vrot.lane.b32.xlu0 %v1519, 32
        %v1549 = vpop.permute.xlu0 %1548
        %1550 = vrot.lane.b32.xlu0 %v1520, 32
        %v1551 = vpop.permute.xlu0 %1550
        %1552 = vrot.lane.b32.xlu0 %v1521, 32
        %v1553 = vpop.permute.xlu0 %1552
        %vm1570 = vcmask 322816
        %1571 = vst.msk [vmem:[#allocation2] sm:$0xf] %vm1570, %v1523
        %1572 = vst.msk [vmem:[#allocation2 + $0x4] sm:$0xf] %vm1570, %v1525
        %1573 = vst.msk [vmem:[#allocation2 + $0x8] sm:$0xf] %vm1570, %v1527
        %1574 = vst.msk [vmem:[#allocation2 + $0xc] sm:$0xf] %vm1570, %v1529
        %1575 = vst.msk [vmem:[#allocation2 + $0x10] sm:$0xf] %vm1570, %v1531
        %1576 = vst.msk [vmem:[#allocation2 + $0x14] sm:$0xf] %vm1570, %v1533
        %1577 = vst.msk [vmem:[#allocation2 + $0x18] sm:$0xf] %vm1570, %v1535
        %1578 = vst.msk [vmem:[#allocation2 + $0x1c] sm:$0xf] %vm1570, %v1537
        %1579 = vst.msk [vmem:[#allocation2 + $0x20] sm:$0xf] %vm1570, %v1539
        %1580 = vst.msk [vmem:[#allocation2 + $0x24] sm:$0xf] %vm1570, %v1541
        %1581 = vst.msk [vmem:[#allocation2 + $0x28] sm:$0xf] %vm1570, %v1543
        %1582 = vst.msk [vmem:[#allocation2 + $0x2c] sm:$0xf] %vm1570, %v1545
        %1583 = vst.msk [vmem:[#allocation2 + $0x30] sm:$0xf] %vm1570, %v1547
        %1584 = vst.msk [vmem:[#allocation2 + $0x34] sm:$0xf] %vm1570, %v1549
        %1585 = vst.msk [vmem:[#allocation2 + $0x38] sm:$0xf] %vm1570, %v1551
        %1586 = vst.msk [vmem:[#allocation2 + $0x3c] sm:$0xf] %vm1570, %v1553
        %vm1587 = vcmp.eq.f32.partialorder %v752, 6.0
        %vm1588 = vcmp.eq.f32.partialorder %v755, 6.0
        %vm1589 = vcmp.eq.f32.partialorder %v760, 6.0
        %vm1590 = vcmp.eq.f32.partialorder %v763, 6.0
        %vm1591 = vcmp.eq.f32.partialorder %v768, 6.0
        %vm1592 = vcmp.eq.f32.partialorder %v771, 6.0
        %vm1593 = vcmp.eq.f32.partialorder %v776, 6.0
        %vm1594 = vcmp.eq.f32.partialorder %v779, 6.0
        %vm1595 = vcmp.eq.f32.partialorder %v784, 6.0
        %vm1596 = vcmp.eq.f32.partialorder %v787, 6.0
        %vm1597 = vcmp.eq.f32.partialorder %v792, 6.0
        %vm1598 = vcmp.eq.f32.partialorder %v795, 6.0
        %vm1599 = vcmp.eq.f32.partialorder %v800, 6.0
        %vm1600 = vcmp.eq.f32.partialorder %v803, 6.0
        %vm1601 = vcmp.eq.f32.partialorder %v808, 6.0
        %vm1602 = vcmp.eq.f32.partialorder %v811, 6.0
        %vm1603 = vmand %vm629, %vm1587
        %vm1604 = vmand %vm630, %vm1588
        %vm1605 = vmand %vm631, %vm1589
        %vm1606 = vmand %vm632, %vm1590
        %vm1607 = vmand %vm633, %vm1591
        %vm1608 = vmand %vm634, %vm1592
        %vm1609 = vmand %vm635, %vm1593
        %vm1610 = vmand %vm636, %vm1594
        %vm1611 = vmand %vm637, %vm1595
        %vm1612 = vmand %vm638, %vm1596
        %vm1613 = vmand %vm639, %vm1597
        %vm1614 = vmand %vm640, %vm1598
        %vm1615 = vmand %vm641, %vm1599
        %vm1616 = vmand %vm642, %vm1600
        %vm1617 = vmand %vm643, %vm1601
        %vm1618 = vmand %vm644, %vm1602
        %v1619 = vsel %vm1603, 1.0, 0.0
        %v1620 = vsel %vm1604, 1.0, 0.0
        %v1621 = vsel %vm1605, 1.0, 0.0
        %v1622 = vsel %vm1606, 1.0, 0.0
        %v1623 = vsel %vm1607, 1.0, 0.0
        %v1624 = vsel %vm1608, 1.0, 0.0
        %v1625 = vsel %vm1609, 1.0, 0.0
        %v1626 = vsel %vm1610, 1.0, 0.0
        %v1627 = vsel %vm1611, 1.0, 0.0
        %v1628 = vsel %vm1612, 1.0, 0.0
        %v1629 = vsel %vm1613, 1.0, 0.0
        %v1630 = vsel %vm1614, 1.0, 0.0
        %v1631 = vsel %vm1615, 1.0, 0.0
        %v1632 = vsel %vm1616, 1.0, 0.0
        %v1633 = vsel %vm1617, 1.0, 0.0
        %v1634 = vsel %vm1618, 1.0, 0.0
        %v1635 = vpack.c.bf16 %v1620, %v1619
        %v1636 = vpack.c.bf16 %v1622, %v1621
        %v1637 = vpack.c.bf16 %v1624, %v1623
        %v1638 = vpack.c.bf16 %v1626, %v1625
        %v1639 = vpack.c.bf16 %v1628, %v1627
        %v1640 = vpack.c.bf16 %v1630, %v1629
        %v1641 = vpack.c.bf16 %v1632, %v1631
        %v1642 = vpack.c.bf16 %v1634, %v1633
        %v1651 = vunpack.c.l.b16 %v1635
        %v1652 = vunpack.c.h.b16 %v1635
        %v1653 = vunpack.c.l.b16 %v1636
        %v1654 = vunpack.c.h.b16 %v1636
        %v1655 = vunpack.c.l.b16 %v1637
        %v1656 = vunpack.c.h.b16 %v1637
        %v1657 = vunpack.c.l.b16 %v1638
        %v1658 = vunpack.c.h.b16 %v1638
        %v1659 = vunpack.c.l.b16 %v1639
        %v1660 = vunpack.c.h.b16 %v1639
        %v1661 = vunpack.c.l.b16 %v1640
        %v1662 = vunpack.c.h.b16 %v1640
        %v1663 = vunpack.c.l.b16 %v1641
        %v1664 = vunpack.c.h.b16 %v1641
        %v1665 = vunpack.c.l.b16 %v1642
        %v1666 = vunpack.c.h.b16 %v1642
        %v1667 = vpack.c.b16 %v1651, %v1651
        %v1668 = vpack.c.b16 %v1652, %v1652
        %v1669 = vpack.c.b16 %v1653, %v1653
        %v1670 = vpack.c.b16 %v1654, %v1654
        %v1671 = vpack.c.b16 %v1655, %v1655
        %v1672 = vpack.c.b16 %v1656, %v1656
        %v1673 = vpack.c.b16 %v1657, %v1657
        %v1674 = vpack.c.b16 %v1658, %v1658
        %v1675 = vpack.c.b16 %v1659, %v1659
        %v1676 = vpack.c.b16 %v1660, %v1660
        %v1677 = vpack.c.b16 %v1661, %v1661
        %v1678 = vpack.c.b16 %v1662, %v1662
        %v1679 = vpack.c.b16 %v1663, %v1663
        %v1680 = vpack.c.b16 %v1664, %v1664
        %v1681 = vpack.c.b16 %v1665, %v1665
        %v1682 = vpack.c.b16 %v1666, %v1666
        %1683 = vrot.lane.b32.xlu0 %v1667, 40
        %v1684 = vpop.permute.xlu0 %1683
        %1685 = vrot.lane.b32.xlu0 %v1668, 40
        %v1686 = vpop.permute.xlu0 %1685
        %1687 = vrot.lane.b32.xlu0 %v1669, 40
        %v1688 = vpop.permute.xlu0 %1687
        %1689 = vrot.lane.b32.xlu0 %v1670, 40
        %v1690 = vpop.permute.xlu0 %1689
        %1691 = vrot.lane.b32.xlu0 %v1671, 40
        %v1692 = vpop.permute.xlu0 %1691
        %1693 = vrot.lane.b32.xlu0 %v1672, 40
        %v1694 = vpop.permute.xlu0 %1693
        %1695 = vrot.lane.b32.xlu0 %v1673, 40
        %v1696 = vpop.permute.xlu0 %1695
        %1697 = vrot.lane.b32.xlu0 %v1674, 40
        %v1698 = vpop.permute.xlu0 %1697
        %1699 = vrot.lane.b32.xlu0 %v1675, 40
        %v1700 = vpop.permute.xlu0 %1699
        %1701 = vrot.lane.b32.xlu0 %v1676, 40
        %v1702 = vpop.permute.xlu0 %1701
        %1703 = vrot.lane.b32.xlu0 %v1677, 40
        %v1704 = vpop.permute.xlu0 %1703
        %1705 = vrot.lane.b32.xlu0 %v1678, 40
        %v1706 = vpop.permute.xlu0 %1705
        %1707 = vrot.lane.b32.xlu0 %v1679, 40
        %v1708 = vpop.permute.xlu0 %1707
        %1709 = vrot.lane.b32.xlu0 %v1680, 40
        %v1710 = vpop.permute.xlu0 %1709
        %1711 = vrot.lane.b32.xlu0 %v1681, 40
        %v1712 = vpop.permute.xlu0 %1711
        %1713 = vrot.lane.b32.xlu0 %v1682, 40
        %v1714 = vpop.permute.xlu0 %1713
        %vm1731 = vcmask 388416
        %1732 = vst.msk [vmem:[#allocation2] sm:$0xf] %vm1731, %v1684
        %1733 = vst.msk [vmem:[#allocation2 + $0x4] sm:$0xf] %vm1731, %v1686
        %1734 = vst.msk [vmem:[#allocation2 + $0x8] sm:$0xf] %vm1731, %v1688
        %1735 = vst.msk [vmem:[#allocation2 + $0xc] sm:$0xf] %vm1731, %v1690
        %1736 = vst.msk [vmem:[#allocation2 + $0x10] sm:$0xf] %vm1731, %v1692
        %1737 = vst.msk [vmem:[#allocation2 + $0x14] sm:$0xf] %vm1731, %v1694
        %1738 = vst.msk [vmem:[#allocation2 + $0x18] sm:$0xf] %vm1731, %v1696
        %1739 = vst.msk [vmem:[#allocation2 + $0x1c] sm:$0xf] %vm1731, %v1698
        %1740 = vst.msk [vmem:[#allocation2 + $0x20] sm:$0xf] %vm1731, %v1700
        %1741 = vst.msk [vmem:[#allocation2 + $0x24] sm:$0xf] %vm1731, %v1702
        %1742 = vst.msk [vmem:[#allocation2 + $0x28] sm:$0xf] %vm1731, %v1704
        %1743 = vst.msk [vmem:[#allocation2 + $0x2c] sm:$0xf] %vm1731, %v1706
        %1744 = vst.msk [vmem:[#allocation2 + $0x30] sm:$0xf] %vm1731, %v1708
        %1745 = vst.msk [vmem:[#allocation2 + $0x34] sm:$0xf] %vm1731, %v1710
        %1746 = vst.msk [vmem:[#allocation2 + $0x38] sm:$0xf] %vm1731, %v1712
        %1747 = vst.msk [vmem:[#allocation2 + $0x3c] sm:$0xf] %vm1731, %v1714
        %vm1748 = vcmp.eq.f32.partialorder %v752, 7.0
        %vm1749 = vcmp.eq.f32.partialorder %v755, 7.0
        %vm1750 = vcmp.eq.f32.partialorder %v760, 7.0
        %vm1751 = vcmp.eq.f32.partialorder %v763, 7.0
        %vm1752 = vcmp.eq.f32.partialorder %v768, 7.0
        %vm1753 = vcmp.eq.f32.partialorder %v771, 7.0
        %vm1754 = vcmp.eq.f32.partialorder %v776, 7.0
        %vm1755 = vcmp.eq.f32.partialorder %v779, 7.0
        %vm1756 = vcmp.eq.f32.partialorder %v784, 7.0
        %vm1757 = vcmp.eq.f32.partialorder %v787, 7.0
        %vm1758 = vcmp.eq.f32.partialorder %v792, 7.0
        %vm1759 = vcmp.eq.f32.partialorder %v795, 7.0
        %vm1760 = vcmp.eq.f32.partialorder %v800, 7.0
        %vm1761 = vcmp.eq.f32.partialorder %v803, 7.0
        %vm1762 = vcmp.eq.f32.partialorder %v808, 7.0
        %vm1763 = vcmp.eq.f32.partialorder %v811, 7.0
        %vm1764 = vmand %vm629, %vm1748
        %vm1765 = vmand %vm630, %vm1749
        %vm1766 = vmand %vm631, %vm1750
        %vm1767 = vmand %vm632, %vm1751
        %vm1768 = vmand %vm633, %vm1752
        %vm1769 = vmand %vm634, %vm1753
        %vm1770 = vmand %vm635, %vm1754
        %vm1771 = vmand %vm636, %vm1755
        %vm1772 = vmand %vm637, %vm1756
        %vm1773 = vmand %vm638, %vm1757
        %vm1774 = vmand %vm639, %vm1758
        %vm1775 = vmand %vm640, %vm1759
        %vm1776 = vmand %vm641, %vm1760
        %vm1777 = vmand %vm642, %vm1761
        %vm1778 = vmand %vm643, %vm1762
        %vm1779 = vmand %vm644, %vm1763
        %v1780 = vsel %vm1764, 1.0, 0.0
        %v1781 = vsel %vm1765, 1.0, 0.0
        %v1782 = vsel %vm1766, 1.0, 0.0
        %v1783 = vsel %vm1767, 1.0, 0.0
        %v1784 = vsel %vm1768, 1.0, 0.0
        %v1785 = vsel %vm1769, 1.0, 0.0
        %v1786 = vsel %vm1770, 1.0, 0.0
        %v1787 = vsel %vm1771, 1.0, 0.0
        %v1788 = vsel %vm1772, 1.0, 0.0
        %v1789 = vsel %vm1773, 1.0, 0.0
        %v1790 = vsel %vm1774, 1.0, 0.0
        %v1791 = vsel %vm1775, 1.0, 0.0
        %v1792 = vsel %vm1776, 1.0, 0.0
        %v1793 = vsel %vm1777, 1.0, 0.0
        %v1794 = vsel %vm1778, 1.0, 0.0
        %v1795 = vsel %vm1779, 1.0, 0.0
        %v1796 = vpack.c.bf16 %v1781, %v1780
        %v1797 = vpack.c.bf16 %v1783, %v1782
        %v1798 = vpack.c.bf16 %v1785, %v1784
        %v1799 = vpack.c.bf16 %v1787, %v1786
        %v1800 = vpack.c.bf16 %v1789, %v1788
        %v1801 = vpack.c.bf16 %v1791, %v1790
        %v1802 = vpack.c.bf16 %v1793, %v1792
        %v1803 = vpack.c.bf16 %v1795, %v1794
        %v1812 = vunpack.c.l.b16 %v1796
        %v1813 = vunpack.c.h.b16 %v1796
        %v1814 = vunpack.c.l.b16 %v1797
        %v1815 = vunpack.c.h.b16 %v1797
        %v1816 = vunpack.c.l.b16 %v1798
        %v1817 = vunpack.c.h.b16 %v1798
        %v1818 = vunpack.c.l.b16 %v1799
        %v1819 = vunpack.c.h.b16 %v1799
        %v1820 = vunpack.c.l.b16 %v1800
        %v1821 = vunpack.c.h.b16 %v1800
        %v1822 = vunpack.c.l.b16 %v1801
        %v1823 = vunpack.c.h.b16 %v1801
        %v1824 = vunpack.c.l.b16 %v1802
        %v1825 = vunpack.c.h.b16 %v1802
        %v1826 = vunpack.c.l.b16 %v1803
        %v1827 = vunpack.c.h.b16 %v1803
        %v1828 = vpack.c.b16 %v1812, %v1812
        %v1829 = vpack.c.b16 %v1813, %v1813
        %v1830 = vpack.c.b16 %v1814, %v1814
        %v1831 = vpack.c.b16 %v1815, %v1815
        %v1832 = vpack.c.b16 %v1816, %v1816
        %v1833 = vpack.c.b16 %v1817, %v1817
        %v1834 = vpack.c.b16 %v1818, %v1818
        %v1835 = vpack.c.b16 %v1819, %v1819
        %v1836 = vpack.c.b16 %v1820, %v1820
        %v1837 = vpack.c.b16 %v1821, %v1821
        %v1838 = vpack.c.b16 %v1822, %v1822
        %v1839 = vpack.c.b16 %v1823, %v1823
        %v1840 = vpack.c.b16 %v1824, %v1824
        %v1841 = vpack.c.b16 %v1825, %v1825
        %v1842 = vpack.c.b16 %v1826, %v1826
        %v1843 = vpack.c.b16 %v1827, %v1827
        %1844 = vrot.lane.b32.xlu0 %v1828, 48
        %v1845 = vpop.permute.xlu0 %1844
        %1846 = vrot.lane.b32.xlu0 %v1829, 48
        %v1847 = vpop.permute.xlu0 %1846
        %1848 = vrot.lane.b32.xlu0 %v1830, 48
        %v1849 = vpop.permute.xlu0 %1848
        %1850 = vrot.lane.b32.xlu0 %v1831, 48
        %v1851 = vpop.permute.xlu0 %1850
        %1852 = vrot.lane.b32.xlu0 %v1832, 48
        %v1853 = vpop.permute.xlu0 %1852
        %1854 = vrot.lane.b32.xlu0 %v1833, 48
        %v1855 = vpop.permute.xlu0 %1854
        %1856 = vrot.lane.b32.xlu0 %v1834, 48
        %v1857 = vpop.permute.xlu0 %1856
        %1858 = vrot.lane.b32.xlu0 %v1835, 48
        %v1859 = vpop.permute.xlu0 %1858
        %1860 = vrot.lane.b32.xlu0 %v1836, 48
        %v1861 = vpop.permute.xlu0 %1860
        %1862 = vrot.lane.b32.xlu0 %v1837, 48
        %v1863 = vpop.permute.xlu0 %1862
        %1864 = vrot.lane.b32.xlu0 %v1838, 48
        %v1865 = vpop.permute.xlu0 %1864
        %1866 = vrot.lane.b32.xlu0 %v1839, 48
        %v1867 = vpop.permute.xlu0 %1866
        %1868 = vrot.lane.b32.xlu0 %v1840, 48
        %v1869 = vpop.permute.xlu0 %1868
        %1870 = vrot.lane.b32.xlu0 %v1841, 48
        %v1871 = vpop.permute.xlu0 %1870
        %1872 = vrot.lane.b32.xlu0 %v1842, 48
        %v1873 = vpop.permute.xlu0 %1872
        %1874 = vrot.lane.b32.xlu0 %v1843, 48
        %v1875 = vpop.permute.xlu0 %1874
        %vm1892 = vcmask 454016
        %1893 = vst.msk [vmem:[#allocation2] sm:$0xf] %vm1892, %v1845
        %1894 = vst.msk [vmem:[#allocation2 + $0x4] sm:$0xf] %vm1892, %v1847
        %1895 = vst.msk [vmem:[#allocation2 + $0x8] sm:$0xf] %vm1892, %v1849
        %1896 = vst.msk [vmem:[#allocation2 + $0xc] sm:$0xf] %vm1892, %v1851
        %1897 = vst.msk [vmem:[#allocation2 + $0x10] sm:$0xf] %vm1892, %v1853
        %1898 = vst.msk [vmem:[#allocation2 + $0x14] sm:$0xf] %vm1892, %v1855
        %1899 = vst.msk [vmem:[#allocation2 + $0x18] sm:$0xf] %vm1892, %v1857
        %1900 = vst.msk [vmem:[#allocation2 + $0x1c] sm:$0xf] %vm1892, %v1859
        %1901 = vst.msk [vmem:[#allocation2 + $0x20] sm:$0xf] %vm1892, %v1861
        %1902 = vst.msk [vmem:[#allocation2 + $0x24] sm:$0xf] %vm1892, %v1863
        %1903 = vst.msk [vmem:[#allocation2 + $0x28] sm:$0xf] %vm1892, %v1865
        %1904 = vst.msk [vmem:[#allocation2 + $0x2c] sm:$0xf] %vm1892, %v1867
        %1905 = vst.msk [vmem:[#allocation2 + $0x30] sm:$0xf] %vm1892, %v1869
        %1906 = vst.msk [vmem:[#allocation2 + $0x34] sm:$0xf] %vm1892, %v1871
        %1907 = vst.msk [vmem:[#allocation2 + $0x38] sm:$0xf] %vm1892, %v1873
        %1908 = vst.msk [vmem:[#allocation2 + $0x3c] sm:$0xf] %vm1892, %v1875
        %vm1909 = vcmp.eq.f32.partialorder %v752, 8.0
        %vm1910 = vcmp.eq.f32.partialorder %v755, 8.0
        %vm1911 = vcmp.eq.f32.partialorder %v760, 8.0
        %vm1912 = vcmp.eq.f32.partialorder %v763, 8.0
        %vm1913 = vcmp.eq.f32.partialorder %v768, 8.0
        %vm1914 = vcmp.eq.f32.partialorder %v771, 8.0
        %vm1915 = vcmp.eq.f32.partialorder %v776, 8.0
        %vm1916 = vcmp.eq.f32.partialorder %v779, 8.0
        %vm1917 = vcmp.eq.f32.partialorder %v784, 8.0
        %vm1918 = vcmp.eq.f32.partialorder %v787, 8.0
        %vm1919 = vcmp.eq.f32.partialorder %v792, 8.0
        %vm1920 = vcmp.eq.f32.partialorder %v795, 8.0
        %vm1921 = vcmp.eq.f32.partialorder %v800, 8.0
        %vm1922 = vcmp.eq.f32.partialorder %v803, 8.0
        %vm1923 = vcmp.eq.f32.partialorder %v808, 8.0
        %vm1924 = vcmp.eq.f32.partialorder %v811, 8.0
        %vm1925 = vmand %vm629, %vm1909
        %vm1926 = vmand %vm630, %vm1910
        %vm1927 = vmand %vm631, %vm1911
        %vm1928 = vmand %vm632, %vm1912
        %vm1929 = vmand %vm633, %vm1913
        %vm1930 = vmand %vm634, %vm1914
        %vm1931 = vmand %vm635, %vm1915
        %vm1932 = vmand %vm636, %vm1916
        %vm1933 = vmand %vm637, %vm1917
        %vm1934 = vmand %vm638, %vm1918
        %vm1935 = vmand %vm639, %vm1919
        %vm1936 = vmand %vm640, %vm1920
        %vm1937 = vmand %vm641, %vm1921
        %vm1938 = vmand %vm642, %vm1922
        %vm1939 = vmand %vm643, %vm1923
        %vm1940 = vmand %vm644, %vm1924
        %v1941 = vsel %vm1925, 1.0, 0.0
        %v1942 = vsel %vm1926, 1.0, 0.0
        %v1943 = vsel %vm1927, 1.0, 0.0
        %v1944 = vsel %vm1928, 1.0, 0.0
        %v1945 = vsel %vm1929, 1.0, 0.0
        %v1946 = vsel %vm1930, 1.0, 0.0
        %v1947 = vsel %vm1931, 1.0, 0.0
        %v1948 = vsel %vm1932, 1.0, 0.0
        %v1949 = vsel %vm1933, 1.0, 0.0
        %v1950 = vsel %vm1934, 1.0, 0.0
        %v1951 = vsel %vm1935, 1.0, 0.0
        %v1952 = vsel %vm1936, 1.0, 0.0
        %v1953 = vsel %vm1937, 1.0, 0.0
        %v1954 = vsel %vm1938, 1.0, 0.0
        %v1955 = vsel %vm1939, 1.0, 0.0
        %v1956 = vsel %vm1940, 1.0, 0.0
        %v1957 = vpack.c.bf16 %v1942, %v1941
        %v1958 = vpack.c.bf16 %v1944, %v1943
        %v1959 = vpack.c.bf16 %v1946, %v1945
        %v1960 = vpack.c.bf16 %v1948, %v1947
        %v1961 = vpack.c.bf16 %v1950, %v1949
        %v1962 = vpack.c.bf16 %v1952, %v1951
        %v1963 = vpack.c.bf16 %v1954, %v1953
        %v1964 = vpack.c.bf16 %v1956, %v1955
        %v1973 = vunpack.c.l.b16 %v1957
        %v1974 = vunpack.c.h.b16 %v1957
        %v1975 = vunpack.c.l.b16 %v1958
        %v1976 = vunpack.c.h.b16 %v1958
        %v1977 = vunpack.c.l.b16 %v1959
        %v1978 = vunpack.c.h.b16 %v1959
        %v1979 = vunpack.c.l.b16 %v1960
        %v1980 = vunpack.c.h.b16 %v1960
        %v1981 = vunpack.c.l.b16 %v1961
        %v1982 = vunpack.c.h.b16 %v1961
        %v1983 = vunpack.c.l.b16 %v1962
        %v1984 = vunpack.c.h.b16 %v1962
        %v1985 = vunpack.c.l.b16 %v1963
        %v1986 = vunpack.c.h.b16 %v1963
        %v1987 = vunpack.c.l.b16 %v1964
        %v1988 = vunpack.c.h.b16 %v1964
        %v1989 = vpack.c.b16 %v1973, %v1973
        %v1990 = vpack.c.b16 %v1974, %v1974
        %v1991 = vpack.c.b16 %v1975, %v1975
        %v1992 = vpack.c.b16 %v1976, %v1976
        %v1993 = vpack.c.b16 %v1977, %v1977
        %v1994 = vpack.c.b16 %v1978, %v1978
        %v1995 = vpack.c.b16 %v1979, %v1979
        %v1996 = vpack.c.b16 %v1980, %v1980
        %v1997 = vpack.c.b16 %v1981, %v1981
        %v1998 = vpack.c.b16 %v1982, %v1982
        %v1999 = vpack.c.b16 %v1983, %v1983
        %v2000 = vpack.c.b16 %v1984, %v1984
        %v2001 = vpack.c.b16 %v1985, %v1985
        %v2002 = vpack.c.b16 %v1986, %v1986
        %v2003 = vpack.c.b16 %v1987, %v1987
        %v2004 = vpack.c.b16 %v1988, %v1988
        %2005 = vrot.lane.b32.xlu0 %v1989, 56
        %v2006 = vpop.permute.xlu0 %2005
        %2007 = vrot.lane.b32.xlu0 %v1990, 56
        %v2008 = vpop.permute.xlu0 %2007
        %2009 = vrot.lane.b32.xlu0 %v1991, 56
        %v2010 = vpop.permute.xlu0 %2009
        %2011 = vrot.lane.b32.xlu0 %v1992, 56
        %v2012 = vpop.permute.xlu0 %2011
        %2013 = vrot.lane.b32.xlu0 %v1993, 56
        %v2014 = vpop.permute.xlu0 %2013
        %2015 = vrot.lane.b32.xlu0 %v1994, 56
        %v2016 = vpop.permute.xlu0 %2015
        %2017 = vrot.lane.b32.xlu0 %v1995, 56
        %v2018 = vpop.permute.xlu0 %2017
        %2019 = vrot.lane.b32.xlu0 %v1996, 56
        %v2020 = vpop.permute.xlu0 %2019
        %2021 = vrot.lane.b32.xlu0 %v1997, 56
        %v2022 = vpop.permute.xlu0 %2021
        %2023 = vrot.lane.b32.xlu0 %v1998, 56
        %v2024 = vpop.permute.xlu0 %2023
        %2025 = vrot.lane.b32.xlu0 %v1999, 56
        %v2026 = vpop.permute.xlu0 %2025
        %2027 = vrot.lane.b32.xlu0 %v2000, 56
        %v2028 = vpop.permute.xlu0 %2027
        %2029 = vrot.lane.b32.xlu0 %v2001, 56
        %v2030 = vpop.permute.xlu0 %2029
        %2031 = vrot.lane.b32.xlu0 %v2002, 56
        %v2032 = vpop.permute.xlu0 %2031
        %2033 = vrot.lane.b32.xlu0 %v2003, 56
        %v2034 = vpop.permute.xlu0 %2033
        %2035 = vrot.lane.b32.xlu0 %v2004, 56
        %v2036 = vpop.permute.xlu0 %2035
        %vm2053 = vcmask 519616
        %2054 = vst.msk [vmem:[#allocation2] sm:$0xf] %vm2053, %v2006
        %2055 = vst.msk [vmem:[#allocation2 + $0x4] sm:$0xf] %vm2053, %v2008
        %2056 = vst.msk [vmem:[#allocation2 + $0x8] sm:$0xf] %vm2053, %v2010
        %2057 = vst.msk [vmem:[#allocation2 + $0xc] sm:$0xf] %vm2053, %v2012
        %2058 = vst.msk [vmem:[#allocation2 + $0x10] sm:$0xf] %vm2053, %v2014
        %2059 = vst.msk [vmem:[#allocation2 + $0x14] sm:$0xf] %vm2053, %v2016
        %2060 = vst.msk [vmem:[#allocation2 + $0x18] sm:$0xf] %vm2053, %v2018
        %2061 = vst.msk [vmem:[#allocation2 + $0x1c] sm:$0xf] %vm2053, %v2020
        %2062 = vst.msk [vmem:[#allocation2 + $0x20] sm:$0xf] %vm2053, %v2022
        %2063 = vst.msk [vmem:[#allocation2 + $0x24] sm:$0xf] %vm2053, %v2024
        %2064 = vst.msk [vmem:[#allocation2 + $0x28] sm:$0xf] %vm2053, %v2026
        %2065 = vst.msk [vmem:[#allocation2 + $0x2c] sm:$0xf] %vm2053, %v2028
        %2066 = vst.msk [vmem:[#allocation2 + $0x30] sm:$0xf] %vm2053, %v2030
        %2067 = vst.msk [vmem:[#allocation2 + $0x34] sm:$0xf] %vm2053, %v2032
        %2068 = vst.msk [vmem:[#allocation2 + $0x38] sm:$0xf] %vm2053, %v2034
        %2069 = vst.msk [vmem:[#allocation2 + $0x3c] sm:$0xf] %vm2053, %v2036
        %v2070 = vld [vmem:[#allocation2] sm:$0xf]
        %v2071 = vld [vmem:[#allocation2 + $0x4] sm:$0xf]
        %v2072 = vld [vmem:[#allocation2 + $0x8] sm:$0xf]
        %v2073 = vld [vmem:[#allocation2 + $0xc] sm:$0xf]
        %v2074 = vld [vmem:[#allocation2 + $0x10] sm:$0xf]
        %v2075 = vld [vmem:[#allocation2 + $0x14] sm:$0xf]
        %v2076 = vld [vmem:[#allocation2 + $0x18] sm:$0xf]
        %v2077 = vld [vmem:[#allocation2 + $0x1c] sm:$0xf]
        %v2078 = vld [vmem:[#allocation2 + $0x20] sm:$0xf]
        %v2079 = vld [vmem:[#allocation2 + $0x24] sm:$0xf]
        %v2080 = vld [vmem:[#allocation2 + $0x28] sm:$0xf]
        %v2081 = vld [vmem:[#allocation2 + $0x2c] sm:$0xf]
        %v2082 = vld [vmem:[#allocation2 + $0x30] sm:$0xf]
        %v2083 = vld [vmem:[#allocation2 + $0x34] sm:$0xf]
        %v2084 = vld [vmem:[#allocation2 + $0x38] sm:$0xf]
        %v2085 = vld [vmem:[#allocation2 + $0x3c] sm:$0xf]
        %v2086 = vld [vmem:[%s350] sm:$0xf]
        %v2087 = vld [vmem:[%s354] sm:$0xf]
        %v2104 = vunpack.c.l.b16 %v2070
        %v2105 = vunpack.c.l.b16 %v2071
        %v2106 = vunpack.c.l.b16 %v2072
        %v2107 = vunpack.c.l.b16 %v2073
        %v2108 = vunpack.c.l.b16 %v2074
        %v2109 = vunpack.c.l.b16 %v2075
        %v2110 = vunpack.c.l.b16 %v2076
        %v2111 = vunpack.c.l.b16 %v2077
        %v2112 = vunpack.c.l.b16 %v2078
        %v2113 = vunpack.c.l.b16 %v2079
        %v2114 = vunpack.c.l.b16 %v2080
        %v2115 = vunpack.c.l.b16 %v2081
        %v2116 = vunpack.c.l.b16 %v2082
        %v2117 = vunpack.c.l.b16 %v2083
        %v2118 = vunpack.c.l.b16 %v2084
        %v2119 = vunpack.c.l.b16 %v2085
        %v2120 = vpack.c.b16 %v2105, %v2104
        %v2121 = vpack.c.b16 %v2107, %v2106
        %v2122 = vpack.c.b16 %v2109, %v2108
        %v2123 = vpack.c.b16 %v2111, %v2110
        %v2124 = vpack.c.b16 %v2113, %v2112
        %v2125 = vpack.c.b16 %v2115, %v2114
        %v2126 = vpack.c.b16 %v2117, %v2116
        %v2127 = vpack.c.b16 %v2119, %v2118
        %2136 = vmatprep.subr.bf16.mxu0 0
        %2137 = vmatpush1.bf16.msra.mxu0 %v2127
        %2138 = vmatprep.subr.bf16.mxu0 0
        %2139 = vmatpush1.bf16.msra.mxu0 %v2126
        %2140 = vmatprep.subr.bf16.mxu0 0
        %2141 = vmatpush1.bf16.msra.mxu0 %v2125
        %2142 = vmatprep.subr.bf16.mxu0 0
        %2143 = vmatpush1.bf16.msra.mxu0 %v2124
        %2144 = vmatprep.subr.bf16.mxu0 0
        %2145 = vmatpush1.bf16.msra.mxu0 %v2123
        %2146 = vmatprep.subr.bf16.mxu0 0
        %2147 = vmatpush1.bf16.msra.mxu0 %v2122
        %2148 = vmatprep.subr.bf16.mxu0 0
        %2149 = vmatpush1.bf16.msra.mxu0 %v2121
        %2150 = vmatprep.subr.bf16.mxu0 0
        %2151 = vmatpush1.bf16.msra.mxu0 %v2120
        %2152 = vmatprep.subr.bf16.mxu0 0
        %2153 = vmatpush2.bf16.msra.mxu0 0
        %2154 = vmatprep.subr.bf16.mxu0 0
        %2155 = vmatpush2.bf16.msra.mxu0 0
        %2156 = vmatprep.subr.bf16.mxu0 0
        %2157 = vmatpush2.bf16.msra.mxu0 0
        %2158 = vmatprep.subr.bf16.mxu0 0
        %2159 = vmatpush2.bf16.msra.mxu0 0
        %2160 = vmatprep.subr.bf16.mxu0 0
        %2161 = vmatpush2.bf16.msra.mxu0 0
        %2162 = vmatprep.subr.bf16.mxu0 0
        %2163 = vmatpush2.bf16.msra.mxu0 0
        %2164 = vmatprep.subr.bf16.mxu0 0
        %2165 = vmatpush2.bf16.msra.mxu0 0
        %2166 = vmatprep.subr.bf16.mxu0 0
        %2167 = vmatpush2.bf16.msra.mxu0 0
        %2168 = vmatprep.mubr.bf16.mxu0 0
        %2169 = vmatmul.mubr.bf16.gmra.mxu0 %v2087
        %v2170 = vpop.f32.mrf.mxu0
        %v2171 = vadd.f32 0.0, %v2170
        %v2172 = vpop.f32.mrf.mxu0
        %v2173 = vpop.f32.mrf.mxu0
        %v2174 = vpop.f32.mrf.mxu0
        %2175 = vdwg.mxu0
        %2176 = vmatprep.subr.bf16.mxu0 0
        %2177 = vmatpush1.bf16.msra.mxu0 %v2127
        %2178 = vmatprep.subr.bf16.mxu0 0
        %2179 = vmatpush1.bf16.msra.mxu0 %v2126
        %2180 = vmatprep.subr.bf16.mxu0 0
        %2181 = vmatpush1.bf16.msra.mxu0 %v2125
        %2182 = vmatprep.subr.bf16.mxu0 0
        %2183 = vmatpush1.bf16.msra.mxu0 %v2124
        %2184 = vmatprep.subr.bf16.mxu0 0
        %2185 = vmatpush1.bf16.msra.mxu0 %v2123
        %2186 = vmatprep.subr.bf16.mxu0 0
        %2187 = vmatpush1.bf16.msra.mxu0 %v2122
        %2188 = vmatprep.subr.bf16.mxu0 0
        %2189 = vmatpush1.bf16.msra.mxu0 %v2121
        %2190 = vmatprep.subr.bf16.mxu0 0
        %2191 = vmatpush1.bf16.msra.mxu0 %v2120
        %2192 = vmatprep.subr.bf16.mxu0 0
        %2193 = vmatpush2.bf16.msra.mxu0 0
        %2194 = vmatprep.subr.bf16.mxu0 0
        %2195 = vmatpush2.bf16.msra.mxu0 0
        %2196 = vmatprep.subr.bf16.mxu0 0
        %2197 = vmatpush2.bf16.msra.mxu0 0
        %2198 = vmatprep.subr.bf16.mxu0 0
        %2199 = vmatpush2.bf16.msra.mxu0 0
        %2200 = vmatprep.subr.bf16.mxu0 0
        %2201 = vmatpush2.bf16.msra.mxu0 0
        %2202 = vmatprep.subr.bf16.mxu0 0
        %2203 = vmatpush2.bf16.msra.mxu0 0
        %2204 = vmatprep.subr.bf16.mxu0 0
        %2205 = vmatpush2.bf16.msra.mxu0 0
        %2206 = vmatprep.subr.bf16.mxu0 0
        %2207 = vmatpush2.bf16.msra.mxu0 0
        %2208 = vmatprep.mubr.bf16.mxu0 0
        %2209 = vmatmul.mubr.bf16.gmra.mxu0 %v2086
        %v2210 = vpop.f32.mrf.mxu0
        %v2211 = vadd.f32 %v2171, %v2210
        %v2212 = vpop.f32.mrf.mxu0
        %v2213 = vpop.f32.mrf.mxu0
        %v2214 = vpop.f32.mrf.mxu0
        %2215 = vdwg.mxu0
        %v2216 = vld [vmem:[%s358] sm:$0xf]
        %2217 = vmatprep.subr.bf16.mxu0 0
        %2218 = vmatpush1.bf16.msra.mxu0 %v2127
        %2219 = vmatprep.subr.bf16.mxu0 0
        %2220 = vmatpush1.bf16.msra.mxu0 %v2126
        %2221 = vmatprep.subr.bf16.mxu0 0
        %2222 = vmatpush1.bf16.msra.mxu0 %v2125
        %2223 = vmatprep.subr.bf16.mxu0 0
        %2224 = vmatpush1.bf16.msra.mxu0 %v2124
        %2225 = vmatprep.subr.bf16.mxu0 0
        %2226 = vmatpush1.bf16.msra.mxu0 %v2123
        %2227 = vmatprep.subr.bf16.mxu0 0
        %2228 = vmatpush1.bf16.msra.mxu0 %v2122
        %2229 = vmatprep.subr.bf16.mxu0 0
        %2230 = vmatpush1.bf16.msra.mxu0 %v2121
        %2231 = vmatprep.subr.bf16.mxu0 0
        %2232 = vmatpush1.bf16.msra.mxu0 %v2120
        %2233 = vmatprep.subr.bf16.mxu0 0
        %2234 = vmatpush2.bf16.msra.mxu0 0
        %2235 = vmatprep.subr.bf16.mxu0 0
        %2236 = vmatpush2.bf16.msra.mxu0 0
        %2237 = vmatprep.subr.bf16.mxu0 0
        %2238 = vmatpush2.bf16.msra.mxu0 0
        %2239 = vmatprep.subr.bf16.mxu0 0
        %2240 = vmatpush2.bf16.msra.mxu0 0
        %2241 = vmatprep.subr.bf16.mxu0 0
        %2242 = vmatpush2.bf16.msra.mxu0 0
        %2243 = vmatprep.subr.bf16.mxu0 0
        %2244 = vmatpush2.bf16.msra.mxu0 0
        %2245 = vmatprep.subr.bf16.mxu0 0
        %2246 = vmatpush2.bf16.msra.mxu0 0
        %2247 = vmatprep.subr.bf16.mxu0 0
        %2248 = vmatpush2.bf16.msra.mxu0 0
        %2249 = vmatprep.mubr.bf16.mxu0 0
        %2250 = vmatmul.mubr.bf16.gmra.mxu0 %v2216
        %v2251 = vpop.f32.mrf.mxu0
        %v2252 = vadd.f32 0.0, %v2251
        %v2253 = vpop.f32.mrf.mxu0
        %v2254 = vpop.f32.mrf.mxu0
        %v2255 = vpop.f32.mrf.mxu0
        %2256 = vdwg.mxu0
        %v2257 = vadd.f32 %v2211, %v2252
        %vm2258 = vcmp.lt.f32.partialorder %v811, 2.0
        %v2259 = vsel %vm2258, 1, 0
        %v2260 = vlaneseq
        %v2261 = vshrl.u32 %v2260, 7
        %v2262 = vsub.s32 7, %v2261
        %v2263 = vrot.slane %v2259, %v2262
        %vm2264 = vcmp.eq.s32.totalorder %v2263, 1
        %2266 = vrot.lane.b32.xlu0 %v2257, 120
        %v2267 = vpop.permute.xlu0 %2266
        %v2269 = vsel %vm2264, %v2257, %v2267
        %vm2270 = vcmp.lt.f32.partialorder %v811, 3.0
        %v2271 = vsel %vm2270, 1, 0
        %v2272 = vlaneseq
        %v2273 = vshrl.u32 %v2272, 7
        %v2274 = vsub.s32 7, %v2273
        %v2275 = vrot.slane %v2271, %v2274
        %vm2276 = vcmp.eq.s32.totalorder %v2275, 1
        %2277 = vrot.lane.b32.xlu0 %v2257, 112
        %v2278 = vpop.permute.xlu0 %2277
        %v2280 = vsel %vm2276, %v2257, %v2278
        %vm2281 = vcmp.lt.f32.partialorder %v811, 4.0
        %v2282 = vsel %vm2281, 1, 0
        %v2283 = vlaneseq
        %v2284 = vshrl.u32 %v2283, 7
        %v2285 = vsub.s32 7, %v2284
        %v2286 = vrot.slane %v2282, %v2285
        %vm2287 = vcmp.eq.s32.totalorder %v2286, 1
        %2288 = vrot.lane.b32.xlu0 %v2257, 104
        %v2289 = vpop.permute.xlu0 %2288
        %v2291 = vsel %vm2287, %v2257, %v2289
        %vm2292 = vcmp.lt.f32.partialorder %v811, 5.0
        %v2293 = vsel %vm2292, 1, 0
        %v2294 = vlaneseq
        %v2295 = vshrl.u32 %v2294, 7
        %v2296 = vsub.s32 7, %v2295
        %v2297 = vrot.slane %v2293, %v2296
        %vm2298 = vcmp.eq.s32.totalorder %v2297, 1
        %2299 = vrot.lane.b32.xlu0 %v2257, 96
        %v2300 = vpop.permute.xlu0 %2299
        %v2302 = vsel %vm2298, %v2257, %v2300
        %vm2303 = vcmp.lt.f32.partialorder %v811, 6.0
        %v2304 = vsel %vm2303, 1, 0
        %v2305 = vlaneseq
        %v2306 = vshrl.u32 %v2305, 7
        %v2307 = vsub.s32 7, %v2306
        %v2308 = vrot.slane %v2304, %v2307
        %vm2309 = vcmp.eq.s32.totalorder %v2308, 1
        %2310 = vrot.lane.b32.xlu0 %v2257, 88
        %v2311 = vpop.permute.xlu0 %2310
        %v2313 = vsel %vm2309, %v2257, %v2311
        %vm2314 = vcmp.lt.f32.partialorder %v811, 7.0
        %v2315 = vsel %vm2314, 1, 0
        %v2316 = vlaneseq
        %v2317 = vshrl.u32 %v2316, 7
        %v2318 = vsub.s32 7, %v2317
        %v2319 = vrot.slane %v2315, %v2318
        %vm2320 = vcmp.eq.s32.totalorder %v2319, 1
        %2321 = vrot.lane.b32.xlu0 %v2257, 80
        %v2322 = vpop.permute.xlu0 %2321
        %v2324 = vsel %vm2320, %v2257, %v2322
        %vm2325 = vcmp.lt.f32.partialorder %v811, 8.0
        %v2326 = vsel %vm2325, 1, 0
        %v2327 = vlaneseq
        %v2328 = vshrl.u32 %v2327, 7
        %v2329 = vsub.s32 7, %v2328
        %v2330 = vrot.slane %v2326, %v2329
        %vm2331 = vcmp.eq.s32.totalorder %v2330, 1
        %2332 = vrot.lane.b32.xlu0 %v2257, 72
        %v2333 = vpop.permute.xlu0 %2332
        %v2335 = vsel %vm2331, %v2257, %v2333
        %2337 = vrot.lane.b32.xlu0 %v2269, 8
        %v2338 = vpop.permute.xlu0 %2337
        %2341 = vrot.lane.b32.xlu0 %v2280, 16
        %v2342 = vpop.permute.xlu0 %2341
        %2345 = vrot.lane.b32.xlu0 %v2291, 24
        %v2346 = vpop.permute.xlu0 %2345
        %2349 = vrot.lane.b32.xlu0 %v2302, 32
        %v2350 = vpop.permute.xlu0 %2349
        %2353 = vrot.lane.b32.xlu0 %v2313, 40
        %v2354 = vpop.permute.xlu0 %2353
        %2357 = vrot.lane.b32.xlu0 %v2324, 48
        %v2358 = vpop.permute.xlu0 %2357
        %2361 = vrot.lane.b32.xlu0 %v2335, 56
        %v2362 = vpop.permute.xlu0 %2361
        %v2364 = vsel %vm431, %v2257, %v2338
        %vm2365 = vcmask 130048
        %v2366 = vsel %vm2365, %v2364, %v2342
        %vm2367 = vcmask 195584
        %v2368 = vsel %vm2367, %v2366, %v2346
        %vm2369 = vcmask 261120
        %v2370 = vsel %vm2369, %v2368, %v2350
        %vm2371 = vcmask 326656
        %v2372 = vsel %vm2371, %v2370, %v2354
        %vm2373 = vcmask 392192
        %v2374 = vsel %vm2373, %v2372, %v2358
        %vm2375 = vcmask 457728
        %v2376 = vsel %vm2375, %v2374, %v2362
        %vm2377 = vcmask 522240
        %2378 = vst.msk [vmem:[%s365] sm:$0x7f] %vm2377, %v2376
        %2380 = vrot.lane.b32.xlu0 %v367, 8
        %v2381 = vpop.permute.xlu0 %2380
        %2383 = vrot.lane.b32.xlu0 %v367, 16
        %v2384 = vpop.permute.xlu0 %2383
        %2386 = vrot.lane.b32.xlu0 %v367, 24
        %v2387 = vpop.permute.xlu0 %2386
        %2389 = vrot.lane.b32.xlu0 %v367, 32
        %v2390 = vpop.permute.xlu0 %2389
        %2392 = vrot.lane.b32.xlu0 %v367, 40
        %v2393 = vpop.permute.xlu0 %2392
        %2395 = vrot.lane.b32.xlu0 %v367, 48
        %v2396 = vpop.permute.xlu0 %2395
        %2398 = vrot.lane.b32.xlu0 %v367, 56
        %v2399 = vpop.permute.xlu0 %2398
        %v2401 = vsel %vm431, %v367, %v2381
        %v2402 = vsel %vm2365, %v2401, %v2384
        %v2403 = vsel %vm2367, %v2402, %v2387
        %v2404 = vsel %vm2369, %v2403, %v2390
        %v2405 = vsel %vm2371, %v2404, %v2393
        %v2406 = vsel %vm2373, %v2405, %v2396
        %v2407 = vsel %vm2375, %v2406, %v2399
        %v2408 = vsub.f32 %v2376, %v2407
        %vm2409 = vcmask 518144
        %2410 = vst.msk [vmem:[%s365] sm:$0x7] %vm2409, %v2408
        %p2411 = scmp.lt.s32.totalorder %s24, 1
        %s2412 = scalar_select %p2411, %s24, 1
        %p2413 = scmp.lt.s32.totalorder %s25, 0
        %s2414 = scalar_select %p2413, %s25, 0
        %s2415 = sadd.s32 %s2414, %s2412
        %s2416 = smul.addr %s2415, 8
        %s2417 = scalar_lea.vmem %s6, %s2416
        // Predicated region
        $region49: #{tpu_custom_call.1} parent=43 // pred_check
          %p2418 = pneg %p205
        $region50: #{tpu_custom_call.1} parent=43 // pred_check_branch
          %2420 = sbr.rel (%p2418) target = $region52
        $region51: #{tpu_custom_call.1} parent=43 // pred_region
          _
        $region52: #{tpu_custom_call.1} parent=43 // pred_fallthru
          _
      $region44: #{tpu_custom_call.1} parent=5 // pred_fallthru
        _
      %p2421 = scmp.le.s32.totalorder 2, %s15
      // Predicated region
      $region53: #{tpu_custom_call.1} parent=5 // pred_check
        %p2422 = pneg %p2421
      $region54: #{tpu_custom_call.1} parent=5 // pred_check_branch
        %2424 = sbr.rel (%p2422) target = $region56
      $region55: #{tpu_custom_call.1} parent=5 // pred_region
        %s2425 = ssub.s32 %s15, 2
        // Predicated region
        $region57: #{tpu_custom_call.1} parent=55 // pred_check
          %p2426 = pneg %p211
        $region58: #{tpu_custom_call.1} parent=55 // pred_check_branch
          %2428 = sbr.rel (%p2426) target = $region60
        $region59: #{tpu_custom_call.1} parent=55 // pred_region
          %p2429 = scmp.lt.s32.totalorder %s26, 1
          %s2430 = scalar_select %p2429, %s26, 1
          %p2431 = scmp.lt.s32.totalorder %s27, 0
          %s2432 = scalar_select %p2431, %s27, 0
          %s2433 = sadd.s32 %s2432, %s2430
          %s2434 = smul.addr %s2433, 8
          %s2435 = scalar_lea.vmem %s6, %s2434
        $region60: #{tpu_custom_call.1} parent=55 // pred_fallthru
          _
      $region56: #{tpu_custom_call.1} parent=5 // pred_fallthru
        _
    $region6: #{tpu_custom_call.1} parent=1 // loop_footer
      %s19 = sadd.s32 1, %s15
    $region7: #{tpu_custom_call.1} parent=1 // loop_footer_branch
      %14 = sbr.rel target = $region3
    $region8: #{tpu_custom_call.1} parent=1 // loop_exit
      _
    %2436 = vsyncpa [#allocation4], 1
    %s2437 = scalar_lea.sflag [#allocation4], 1
    %2438 = vsyncpa %s2437, 1

</llo_original>
